<compile_context>
chip_gen: v6e
topology: v6e:2x2x1
jax: 0.10.0
libtpu: 0.0.40
codegen_flags: <defaults>
</compile_context>

<pallas_src>
import functools

import jax
import jax.numpy as jnp
from jax.experimental import pallas as pl
from jax.experimental.pallas import tpu as pltpu


def _self_attn_kernel(qe_ref, xk_ref, xr_ref, v_ref, cb_ref, gamma_ref, out_ref,
                      *attn_refs, mxu_dtype, write_attn):
    # qe_ref : (1, TQ, C)  mxu_dtype   query side  qe_i = (Wq^T Wk)^T x_i
    # xk_ref : (1, C, Np)  mxu_dtype   key side (raw x), resident across q tiles
    # xr_ref : (1, C, TQ)  f32         x tile for the residual
    # v_ref  : (1, C, Np)  mxu_dtype   value projection Wv x + bv
    # cb_ref : (1, 1, Np)  f32         (Wk^T bq).x_j  (+ -1e30 on padded key columns)
    # gamma  : (1,)        f32, SMEM
    # out_ref: (1, C, TQ)  f32         lane-dense output tile
    # attn_refs: ((1, TQ, Np),) iff write_attn
    qe = qe_ref[0]                                     # (TQ, C)
    xk = xk_ref[0]                                     # (C, Np)
    v_cn = v_ref[0]                                    # (C, Np)
    cb = cb_ref[0]                                     # (1, Np)

    # energy[i, j] = qe_i . x_j + cb_j  (== softmax argument of the original module,
    # up to row-constant terms that cancel exactly under softmax over j).
    energy = jax.lax.dot_general(
        qe, xk,
        dimension_numbers=(((1,), (0,)), ((), ())),
        preferred_element_type=jnp.float32) + cb        # (TQ, Np) f32

    # Row softmax in f32.  NOTE: for C << Np this exp is the binding (EUP) slot; a
    # bf16 exp would roughly double softmax throughput on v6e/v7x if tolerance allows.
    m = jnp.max(energy, axis=-1, keepdims=True)
    e = jnp.exp(energy - m)
    denom = jnp.sum(e, axis=-1, keepdims=True)
    attn = e * pl.reciprocal(denom, approx=False)       # (TQ, Np) f32

    # out[c, i] = sum_j v[c, j] * attn[i, j]  -> (C, TQ): lane-dense, no transpose.
    o_ct = jax.lax.dot_general(
        v_cn, attn.astype(mxu_dtype),
        dimension_numbers=(((1,), (1,)), ((), ())),
        preferred_element_type=jnp.float32)              # (C, TQ) f32

    out_ref[0] = gamma_ref[0] * o_ct + xr_ref[0]

    if write_attn:
        attn_refs[0][0] = attn.astype(attn_refs[0].dtype)


def _vmem_capacity_bytes():
    try:
        return int(pltpu.get_tpu_info().vmem_capacity_bytes)
    except Exception:
        return 64 * 1024 * 1024   # conservative fallback (v7x capacity)


def _tile_bytes(tq, np_, c, mxu_bytes, attn_bytes, write_attn):
    """Rough per-grid-step VMEM working set (double-buffered blocks + live slabs)."""
    f = 4
    est = (2 * tq * c * mxu_bytes          # qe block
           + 2 * c * np_ * mxu_bytes       # xk block
           + 2 * c * tq * f                # x residual block
           + 2 * c * np_ * mxu_bytes       # v block
           + 2 * np_ * f                   # cb block
           + 2 * c * tq * f                # out block
           + tq * np_ * (3 * f + mxu_bytes)  # energy / e / attn live + bf16 cast
           + c * tq * f)                   # o
    if write_attn:
        est += 2 * tq * np_ * attn_bytes   # attn out block
    return est


def _pick_tq(np_, c, budget_bytes, mxu_bytes, attn_bytes, write_attn):
    """Largest lane-aligned q-row tile whose working set fits the VMEM budget."""
    cands = sorted({t for t in (np_, 1024, 512, 256, 128)
                    if t % 128 == 0 and np_ % t == 0}, reverse=True)
    for tq in cands:
        if _tile_bytes(tq, np_, c, mxu_bytes, attn_bytes, write_attn) <= budget_bytes:
            return tq
    # TODO(synk): for N so large that even TQ=128 overflows VMEM, a flash-style
    # key-axis grid (online softmax) would be needed; not required for SAGAN sizes.
    return 128


def self_attn_pallas(x_nchw, wq, bq, wk, bk, wv, bv, gamma, *,
                     mxu_dtype=jnp.bfloat16, attn_dtype=jnp.float32,
                     return_attention=True):
    """SAGAN Self_Attn forward.  x_nchw: (B, C, W, H); conv weights in PyTorch layout
    (wq/wk: (C//8, C, 1, 1), wv: (C, C, 1, 1)); biases 1-D; gamma: (1,).
    Returns (out (B, C, W, H), attention (B, N, N) or None).
    mxu_dtype=jnp.float32 gives strict-tolerance parity with the reference."""
    B, C, W, H = x_nchw.shape
    N = W * H
    C8 = wq.shape[0]
    # bk adds a row-constant term to energy -> exact no-op under softmax; unused.

    # Pad N up to a lane multiple so q tiles stay big and stores stay unmasked.
    Np = ((N + 127) // 128) * 128

    x_cn = x_nchw.reshape(B, C, N).astype(jnp.float32)   # free reshape, no transpose
    if Np != N:
        x_cn = jnp.pad(x_cn, ((0, 0), (0, 0), (0, Np - N)))

    # Fold the query/key 1x1 convs and hoist the per-batch O(N*C^2) precompute to XLA.
    wq_m = wq.reshape(C8, C).astype(jnp.float32)
    wk_m = wk.reshape(C8, C).astype(jnp.float32)
    wv_m = wv.reshape(C, C).astype(jnp.float32)
    we = wq_m.T @ wk_m                                    # (C, C) = Wq^T Wk
    bkq = wk_m.T @ bq.astype(jnp.float32)                 # (C,)   = Wk^T bq

    qe = jnp.einsum('dc,bdn->bnc', we, x_cn).astype(mxu_dtype)           # (B, Np, C)
    x_kv = x_cn.astype(mxu_dtype)                                        # (B, C, Np)
    v_cn = (jnp.einsum('cd,bdn->bcn', wv_m, x_cn)
            + bv.astype(jnp.float32)[None, :, None]).astype(mxu_dtype)   # (B, C, Np)
    cb = jnp.einsum('c,bcn->bn', bkq, x_cn)                              # (B, Np) f32
    if Np != N:
        pad = jnp.arange(Np) >= N
        cb = jnp.where(pad[None, :], jnp.float32(-1e30), cb)  # mask padded key columns
    cb = cb.reshape(B, 1, Np)
    gamma_arr = gamma.reshape(1).astype(jnp.float32)

    # VMEM-aware tiling: cap the limit at the real per-generation capacity.
    mxu_bytes = jnp.dtype(mxu_dtype).itemsize
    attn_bytes = jnp.dtype(attn_dtype).itemsize
    vmem_cap = max(_vmem_capacity_bytes() - 8 * 1024 * 1024, 32 * 1024 * 1024)
    TQ = _pick_tq(Np, C, int(0.75 * vmem_cap), mxu_bytes, attn_bytes, return_attention)
    num_q = Np // TQ
    est = _tile_bytes(TQ, Np, C, mxu_bytes, attn_bytes, return_attention)
    vmem_limit = int(min(vmem_cap, max(32 * 1024 * 1024, 4 * est)))

    kernel = functools.partial(_self_attn_kernel, mxu_dtype=mxu_dtype,
                               write_attn=return_attention)

    in_specs = [
        pl.BlockSpec((1, TQ, C), lambda b, q: (b, q, 0)),    # qe tile
        # Per-batch blocks below are constant across the q axis, so Pallas keeps them
        # resident (no re-DMA per tile); default double-buffering additionally hides
        # the next batch's fetch behind the current batch's last q tiles.  If VMEM
        # gets tight, pipeline_mode=pl.Buffered(1) on these is the lever to pull.
        pl.BlockSpec((1, C, Np), lambda b, q: (b, 0, 0)),    # x (key side)
        pl.BlockSpec((1, C, TQ), lambda b, q: (b, 0, q)),    # x (residual tile, f32)
        pl.BlockSpec((1, C, Np), lambda b, q: (b, 0, 0)),    # v
        pl.BlockSpec((1, 1, Np), lambda b, q: (b, 0, 0)),    # cb
        pl.BlockSpec(memory_space=pltpu.MemorySpace.SMEM),   # gamma (scalar)
    ]
    out_shape = [jax.ShapeDtypeStruct((B, C, Np), jnp.float32)]
    out_specs = [pl.BlockSpec((1, C, TQ), lambda b, q: (b, 0, q))]
    if return_attention:
        out_shape.append(jax.ShapeDtypeStruct((B, Np, Np), attn_dtype))
        out_specs.append(pl.BlockSpec((1, TQ, Np), lambda b, q: (b, q, 0)))

    results = pl.pallas_call(
        kernel,
        out_shape=tuple(out_shape),
        grid_spec=pltpu.PrefetchScalarGridSpec(
            num_scalar_prefetch=0,
            grid=(B, num_q),
            in_specs=in_specs,
            out_specs=tuple(out_specs),
        ),
        compiler_params=pltpu.CompilerParams(
            dimension_semantics=("parallel", "parallel"),
            vmem_limit_bytes=vmem_limit),
    )(qe, x_kv, x_cn, v_cn, cb, gamma_arr)

    out = results[0][:, :, :N].reshape(B, C, W, H)
    attn = results[1][:, :N, :N] if return_attention else None
    return out, attn


def self_attn_ref(x_nchw, wq, bq, wk, bk, wv, bv, gamma):
    """Pure-JAX reference mirroring the PyTorch forward (no fusion)."""
    B, C, W, H = x_nchw.shape
    N = W * H
    C8 = wq.shape[0]
    x = x_nchw.astype(jnp.float32)
    xf = x.reshape(B, C, N)                                       # (B, C, N)
    q = jnp.einsum('oc,bcn->bon', wq.reshape(C8, C), xf) + bq.reshape(1, C8, 1)
    k = jnp.einsum('oc,bcn->bon', wk.reshape(C8, C), xf) + bk.reshape(1, C8, 1)
    v = jnp.einsum('oc,bcn->bon', wv.reshape(C, C), xf) + bv.reshape(1, C, 1)
    energy = jnp.einsum('bci,bcj->bij', q, k)                     # (B, N, N)
    attn = jax.nn.softmax(energy, axis=-1)
    out = jnp.einsum('bcj,bij->bci', v, attn)                     # (B, C, N)
    out = out.reshape(B, C, W, H)
    out = gamma.reshape(()) * out + x
    return out, attn


if __name__ == "__main__":
    B, C, W, H = 2, 16, 16, 16        # in_dim = 16 -> query/key channels = 2, N = 256
    C8 = C // 8

    key = jax.random.PRNGKey(0)
    ks = jax.random.split(key, 8)
    x = jax.random.normal(ks[0], (B, C, W, H), dtype=jnp.float32)
    wq = 0.1 * jax.random.normal(ks[1], (C8, C, 1, 1), dtype=jnp.float32)
    bq = 0.1 * jax.random.normal(ks[2], (C8,), dtype=jnp.float32)
    wk = 0.1 * jax.random.normal(ks[3], (C8, C, 1, 1), dtype=jnp.float32)
    bk = 0.1 * jax.random.normal(ks[4], (C8,), dtype=jnp.float32)
    wv = 0.1 * jax.random.normal(ks[5], (C, C, 1, 1), dtype=jnp.float32)
    bv = 0.1 * jax.random.normal(ks[6], (C,), dtype=jnp.float32)
    # nn.Parameter(torch.zeros(1)) -> set nonzero here so the attention path is exercised.
    gamma = jnp.array([0.5], dtype=jnp.float32)

    out_r, attn_r = self_attn_ref(x, wq, bq, wk, bk, wv, bv, gamma)

    # 1) f32 MXU path: strict parity with the reference.
    out, attn = self_attn_pallas(x, wq, bq, wk, bk, wv, bv, gamma,
                                 mxu_dtype=jnp.float32)
    out, attn = jax.block_until_ready((out, attn))
    assert out.shape == (B, C, W, H) and attn.shape == (B, W * H, W * H)
    assert jnp.allclose(out, out_r, atol=1e-4, rtol=1e-4)
    assert jnp.allclose(attn, attn_r, atol=1e-5, rtol=1e-4)

    # 2) default path (bf16 MXU operands) + bf16 attention writeback: loose tolerances.
    out_b, attn_b = self_attn_pallas(x, wq, bq, wk, bk, wv, bv, gamma,
                                     attn_dtype=jnp.bfloat16)
    out_b, attn_b = jax.block_until_ready((out_b, attn_b))
    assert jnp.allclose(out_b, out_r, atol=2e-2, rtol=2e-2)
    assert jnp.allclose(attn_b.astype(jnp.float32), attn_r, atol=2e-3, rtol=0.0)

    # 3) N not a multiple of 128 (exercises the -1e30 key-pad masking): strict f32.
    Wp = Hp = 10
    xp = jax.random.normal(ks[7], (B, C, Wp, Hp), dtype=jnp.float32)
    out_p, attn_p = self_attn_pallas(xp, wq, bq, wk, bk, wv, bv, gamma,
                                     mxu_dtype=jnp.float32)
    out_p, attn_p = jax.block_until_ready((out_p, attn_p))
    out_pr, attn_pr = self_attn_ref(xp, wq, bq, wk, bk, wv, bv, gamma)
    assert out_p.shape == (B, C, Wp, Hp) and attn_p.shape == (B, Wp * Hp, Wp * Hp)
    assert jnp.allclose(out_p, out_pr, atol=1e-4, rtol=1e-4)
    assert jnp.allclose(attn_p, attn_pr, atol=1e-5, rtol=1e-4)

    # 4) attention writeback elided (out only).
    out_n, attn_n = self_attn_pallas(x, wq, bq, wk, bk, wv, bv, gamma,
                                     mxu_dtype=jnp.float32, return_attention=False)
    out_n = jax.block_until_ready(out_n)
    assert attn_n is None
    assert jnp.allclose(out_n, out_r, atol=1e-4, rtol=1e-4)

    print("KERNEL_OK")
</pallas_src>

<mosaic_0001>
module attributes {stable_mosaic.version = 11 : i64} {
  func.func @_self_attn_kernel(%arg0: i32, %arg1: i32, %arg2: memref<1x256x16xf32, #tpu.memory_space<vmem>>, %arg3: memref<1x16x256xf32, #tpu.memory_space<vmem>>, %arg4: memref<1x16x256xf32, #tpu.memory_space<vmem>>, %arg5: memref<1x16x256xf32, #tpu.memory_space<vmem>>, %arg6: memref<1x1x256xf32, #tpu.memory_space<vmem>>, %arg7: memref<1xf32, #tpu.memory_space<smem>>, %arg8: memref<1x16x256xf32, #tpu.memory_space<vmem>>, %arg9: memref<1x256x256xf32, #tpu.memory_space<vmem>>) attributes {dimension_semantics = [#tpu.dimension_semantics<parallel>, #tpu.dimension_semantics<parallel>], iteration_bounds = array<i64: 2, 1>, scalar_prefetch = 0 : i64, scratch_operands = 0 : i64, tpu.core_type = #tpu.core_type<tc>, window_params = [{transform_indices = @transform_0, window_bounds = array<i64: 1, 256, 16>}, {transform_indices = @transform_1, window_bounds = array<i64: 1, 16, 256>}, {transform_indices = @transform_2, window_bounds = array<i64: 1, 16, 256>}, {transform_indices = @transform_3, window_bounds = array<i64: 1, 16, 256>}, {transform_indices = @transform_4, window_bounds = array<i64: 1, 1, 256>}, {transform_indices = @transform_5, window_bounds = array<i64: 1>}, {transform_indices = @transform_6, window_bounds = array<i64: 1, 16, 256>}, {transform_indices = @transform_7, window_bounds = array<i64: 1, 256, 256>}]} {
    %c0 = arith.constant 0 : index
    %c0_0 = arith.constant 0 : index
    %c0_1 = arith.constant 0 : index
    %0 = vector.load %arg2[%c0, %c0_0, %c0_1] : memref<1x256x16xf32, #tpu.memory_space<vmem>>, vector<1x256x16xf32>
    %1 = vector.shape_cast %0 : vector<1x256x16xf32> to vector<256x16xf32>
    %c0_2 = arith.constant 0 : index
    %c0_3 = arith.constant 0 : index
    %c0_4 = arith.constant 0 : index
    %2 = vector.load %arg3[%c0_2, %c0_3, %c0_4] : memref<1x16x256xf32, #tpu.memory_space<vmem>>, vector<1x16x256xf32>
    %3 = vector.shape_cast %2 : vector<1x16x256xf32> to vector<16x256xf32>
    %c0_5 = arith.constant 0 : index
    %c0_6 = arith.constant 0 : index
    %c0_7 = arith.constant 0 : index
    %4 = vector.load %arg5[%c0_5, %c0_6, %c0_7] : memref<1x16x256xf32, #tpu.memory_space<vmem>>, vector<1x16x256xf32>
    %5 = vector.shape_cast %4 : vector<1x16x256xf32> to vector<16x256xf32>
    %c0_8 = arith.constant 0 : index
    %c0_9 = arith.constant 0 : index
    %c0_10 = arith.constant 0 : index
    %6 = vector.load %arg6[%c0_8, %c0_9, %c0_10] : memref<1x1x256xf32, #tpu.memory_space<vmem>>, vector<1x1x256xf32>
    %7 = vector.shape_cast %6 : vector<1x1x256xf32> to vector<1x256xf32>
    %cst = arith.constant dense<0.000000e+00> : vector<256x256xf32>
    %8 = tpu.matmul %1, %3, %cst {dimension_numbers = #tpu.dot_dimension_numbers<[1], [0], [0], [1], [0, 0, 1, 1], [], []>} : vector<256x16xf32>, vector<16x256xf32>, vector<256x256xf32> -> vector<256x256xf32>
    %9 = vector.broadcast %7 : vector<1x256xf32> to vector<256x256xf32>
    %10 = arith.addf %8, %9 : vector<256x256xf32>
    %cst_11 = arith.constant dense<0xFF800000> : vector<256xf32>
    %11 = vector.multi_reduction <maximumf>, %10, %cst_11 [1] : vector<256x256xf32> to vector<256xf32>
    %12 = vector.shape_cast %11 : vector<256xf32> to vector<256x1xf32>
    %13 = vector.broadcast %12 : vector<256x1xf32> to vector<256x256xf32>
    %14 = arith.subf %10, %13 : vector<256x256xf32>
    %15 = math.exp %14 : vector<256x256xf32>
    %cst_12 = arith.constant dense<0.000000e+00> : vector<256xf32>
    %16 = vector.multi_reduction <add>, %15, %cst_12 [1] : vector<256x256xf32> to vector<256xf32>
    %17 = vector.shape_cast %16 : vector<256xf32> to vector<256x1xf32>
    %18 = tpu.reciprocal %17 : vector<256x1xf32> -> vector<256x1xf32>
    %19 = vector.broadcast %18 : vector<256x1xf32> to vector<256x256xf32>
    %20 = arith.mulf %15, %19 : vector<256x256xf32>
    %cst_13 = arith.constant dense<0.000000e+00> : vector<16x256xf32>
    %21 = tpu.matmul %5, %20, %cst_13 {dimension_numbers = #tpu.dot_dimension_numbers<[1], [1], [0], [0], [0, 0, 1, 0], [], []>} : vector<16x256xf32>, vector<256x256xf32>, vector<16x256xf32> -> vector<16x256xf32>
    %c0_14 = arith.constant 0 : index
    %22 = memref.load %arg7[%c0_14] : memref<1xf32, #tpu.memory_space<smem>>
    %23 = vector.broadcast %22 : f32 to vector<16x256xf32>
    %24 = arith.mulf %23, %21 : vector<16x256xf32>
    %c0_15 = arith.constant 0 : index
    %c0_16 = arith.constant 0 : index
    %c0_17 = arith.constant 0 : index
    %25 = vector.load %arg4[%c0_15, %c0_16, %c0_17] : memref<1x16x256xf32, #tpu.memory_space<vmem>>, vector<1x16x256xf32>
    %26 = vector.shape_cast %25 : vector<1x16x256xf32> to vector<16x256xf32>
    %27 = arith.addf %24, %26 : vector<16x256xf32>
    %c0_18 = arith.constant 0 : index
    %c0_19 = arith.constant 0 : index
    %c0_20 = arith.constant 0 : index
    %28 = vector.load %arg8[%c0_18, %c0_19, %c0_20] : memref<1x16x256xf32, #tpu.memory_space<vmem>>, vector<1x16x256xf32>
    %29 = vector.shape_cast %28 : vector<1x16x256xf32> to vector<16x256xf32>
    %30 = vector.shape_cast %27 : vector<16x256xf32> to vector<1x16x256xf32>
    tpu.vector_store %arg8[%c0_18, %c0_19, %c0_20], %30 {strides = array<i32>} : memref<1x16x256xf32, #tpu.memory_space<vmem>>, vector<1x16x256xf32>,
    %c0_21 = arith.constant 0 : index
    %c0_22 = arith.constant 0 : index
    %c0_23 = arith.constant 0 : index
    %31 = vector.load %arg9[%c0_21, %c0_22, %c0_23] : memref<1x256x256xf32, #tpu.memory_space<vmem>>, vector<1x256x256xf32>
    %32 = vector.shape_cast %31 : vector<1x256x256xf32> to vector<256x256xf32>
    %33 = vector.shape_cast %20 : vector<256x256xf32> to vector<1x256x256xf32>
    tpu.vector_store %arg9[%c0_21, %c0_22, %c0_23], %33 {strides = array<i32>} : memref<1x256x256xf32, #tpu.memory_space<vmem>>, vector<1x256x256xf32>,
    return
  }
  func.func @transform_0(%arg0: i32, %arg1: i32) -> (i32, i32, i32) {
    %c0_i32 = arith.constant 0 : i32
    %c0_i32_0 = arith.constant 0 : i32
    return %arg0, %arg1, %c0_i32 : i32, i32, i32
  }
  func.func @transform_1(%arg0: i32, %arg1: i32) -> (i32, i32, i32) {
    %c0_i32 = arith.constant 0 : i32
    %c0_i32_0 = arith.constant 0 : i32
    %c0_i32_1 = arith.constant 0 : i32
    return %arg0, %c0_i32, %c0_i32_0 : i32, i32, i32
  }
  func.func @transform_2(%arg0: i32, %arg1: i32) -> (i32, i32, i32) {
    %c0_i32 = arith.constant 0 : i32
    %c0_i32_0 = arith.constant 0 : i32
    return %arg0, %c0_i32, %arg1 : i32, i32, i32
  }
  func.func @transform_3(%arg0: i32, %arg1: i32) -> (i32, i32, i32) {
    %c0_i32 = arith.constant 0 : i32
    %c0_i32_0 = arith.constant 0 : i32
    %c0_i32_1 = arith.constant 0 : i32
    return %arg0, %c0_i32, %c0_i32_0 : i32, i32, i32
  }
  func.func @transform_4(%arg0: i32, %arg1: i32) -> (i32, i32, i32) {
    %c0_i32 = arith.constant 0 : i32
    %c0_i32_0 = arith.constant 0 : i32
    %c0_i32_1 = arith.constant 0 : i32
    return %arg0, %c0_i32, %c0_i32_0 : i32, i32, i32
  }
  func.func @transform_5(%arg0: i32, %arg1: i32) -> i32 {
    %c0_i32 = arith.constant 0 : i32
    %c0_i32_0 = arith.constant 0 : i32
    return %c0_i32 : i32
  }
  func.func @transform_6(%arg0: i32, %arg1: i32) -> (i32, i32, i32) {
    %c0_i32 = arith.constant 0 : i32
    %c0_i32_0 = arith.constant 0 : i32
    return %arg0, %c0_i32, %arg1 : i32, i32, i32
  }
  func.func @transform_7(%arg0: i32, %arg1: i32) -> (i32, i32, i32) {
    %c0_i32 = arith.constant 0 : i32
    %c0_i32_0 = arith.constant 0 : i32
    return %arg0, %arg1, %c0_i32 : i32, i32, i32
  }
}

</mosaic_0001>

<llo_original>
// kernel: tpu_custom_call.1
$region0: #{tpu_custom_call.1}
  #allocation0 [shape = 'u32[]', space=smem, size = 0x4, offset = 0x4, fixed_abs, tag = 'smem constant byte address 0x4 - core index']
  #allocation1 [shape = 'u32[144,128]{1,0:T(1,128)}', space=vmem, size = 0x12000, scoped, tag = 'internal scratch']
  #allocation2 [shape = 'f32[1]{0:T(128)S(6)}', space=smem, size = 0x200, scoped, tag = 'scoped memory for tpu_custom_call.1']
  %s0 = inlined_call_operand.vmem [shape: f32[2,256,16], index: 0, kind: input, shape index: {}]
  %s1 = inlined_call_operand.vmem [shape: f32[2,16,256], index: 1, kind: input, shape index: {}]
  %s2 = inlined_call_operand.vmem [shape: f32[2,16,256], index: 2, kind: input, shape index: {}]
  %s3 = inlined_call_operand.vmem [shape: f32[2,16,256], index: 3, kind: input, shape index: {}]
  %s4 = inlined_call_operand.vmem [shape: f32[2,1,256], index: 4, kind: input, shape index: {}]
  %s5 = inlined_call_operand.<no memory space> [shape: f32[1], index: 5, kind: input, shape index: {}]
  %s6 = inlined_call_operand.hbm [shape: f32[2,16,256], index: 6, kind: output, shape index: {0}]
  %s7 = inlined_call_operand.hbm [shape: f32[2,256,256], index: 7, kind: output, shape index: {1}]
  %8 = xla_tuple %s6, %s7
  %s9 = sld [smem:[#allocation0]]
  $region65: #{tpu_custom_call.1} parent=0
    _
  %s11 = ssub.s32 1, %s9
  %s12 = scalar_select 0, %s11, %s9
  %13 = sst [smem:[#allocation2]] %s5
  $region1: #{tpu_custom_call.1} parent=0
    #allocation3 [shape = 'u8[32768]{0}', space=vmem, size = 0x8000, scoped, tag = 'output window, operand 0']
    #allocation4 [shape = 's32[2]{0}', space=sflag, size = 0x8, scoped, tag = 'scoped memory for tpu_custom_call.1']
    #allocation5 [shape = 'u8[524288]{0}', space=vmem, size = 0x80000, scoped, tag = 'output window, operand 1']
    #allocation6 [shape = 's32[2]{0}', space=sflag, size = 0x8, scoped, tag = 'scoped memory for tpu_custom_call.1']
    %14 = vsyncpa [#allocation4], 0
    %s15 = scalar_lea.sflag [#allocation4], 1
    %16 = vsyncpa %s15, 0
    %17 = vsyncpa [#allocation6], 0
    %s18 = scalar_lea.sflag [#allocation6], 1
    %19 = vsyncpa %s18, 0
    loop: start=0, step=1, limit=4
    $region2: #{tpu_custom_call.1} parent=1 // loop_pre_header
      _
    $region3: #{tpu_custom_call.1} parent=1 // loop_header
      %s21 = sphi 0, %s25
      %p22 = scmp.ge.s32.totalorder %s21, 4
      %s28 = sphi 0, %s40
      %s29 = sphi 0, %s36
      %s30 = sphi 0, %s28
      %s31 = sphi 0, %s29
      %s32 = sphi 0, %s30
      %s33 = sphi 0, %s31
      %s45 = sphi 0, %s47
      %s48 = sphi 0, %s45
      %s49 = sphi 0, %s48
      %s65 = sphi 0, %s49
      %s71 = sphi 0, %s73
      %s74 = sphi 0, %s71
      %s75 = sphi 0, %s74
      %s91 = sphi 0, %s75
      %s99 = sphi 0, %s101
      %s102 = sphi 0, %s99
      %s103 = sphi 0, %s102
      %s119 = sphi 0, %s103
      %s125 = sphi 0, %s127
      %s128 = sphi 0, %s125
      %s129 = sphi 0, %s128
      %s145 = sphi 0, %s129
      %s151 = sphi 0, %s153
      %s154 = sphi 0, %s151
      %s155 = sphi 0, %s154
      %s171 = sphi 0, %s155
      %s175 = sphi 0, %s175
      %s177 = sphi 0, %s175
      %s178 = sphi 0, %s177
      %s192 = sphi 0, %s178
      %s200 = sphi 0, %s202
      %s203 = sphi 0, %s200
      %s204 = sphi 0, %s203
      %s220 = sphi 0, %s204
      %s228 = sphi 0, %s230
      %s231 = sphi 0, %s228
      %s232 = sphi 0, %s231
      %s248 = sphi 0, %s232
    $region4: #{tpu_custom_call.1} parent=1 // loop_header_branch
      %24 = sbr.rel (%p22) target = $region8
    $region5: #{tpu_custom_call.1} parent=1 // loop_body
      %s26 = ssub.s32 %s21, 1
      %s27 = ssub.s32 %s21, 2
      %s34 = sadd.s32 1, %s29
      %p35 = scmp.ge.s32.totalorder %s34, 1
      %s36 = scalar_select %p35, 0, %s34
      %s37 = sadd.s32 1, %s28
      %s38 = scalar_select %p35, %s37, %s28
      %p39 = scmp.ge.s32.totalorder %s38, 2
      %s40 = scalar_select %p39, 0, %s38
      %s41 = ssub.s32 %s28, %s40
      %s42 = ssub.s32 %s29, %s36
      %s43 = sor.u32 %s41, %s42
      %p44 = scmp.eq.s32.totalorder %s43, 0
      %s46 = sadd.s32 %s45, 1
      %s47 = scalar_select %p44, %s45, %s46
      %p50 = pneg %p44
      %p51 = scmp.eq.s32.totalorder %s21, 1
      %p52 = por %p50, %p51
      %p53 = scmp.ne.s32.totalorder %s45, %s48
      %p54 = scmp.eq.s32.totalorder %s21, 0
      %p55 = por %p53, %p54
      %p56 = scmp.ne.s32.totalorder %s45, %s48
      %p57 = scmp.eq.s32.totalorder %s26, 1
      %p58 = por %p56, %p57
      %p59 = scmp.ne.s32.totalorder %s48, %s49
      %p60 = scmp.eq.s32.totalorder %s26, 0
      %p61 = por %p59, %p60
      %p62 = scmp.ne.s32.totalorder %s48, %s49
      %p63 = scmp.eq.s32.totalorder %s27, 1
      %p64 = por %p62, %p63
      %p66 = scmp.ne.s32.totalorder %s49, %s65
      %p67 = scmp.eq.s32.totalorder %s27, 0
      %p68 = por %p66, %p67
      %s69 = ssub.s32 %s28, %s40
      %p70 = scmp.eq.s32.totalorder %s69, 0
      %s72 = sadd.s32 %s71, 1
      %s73 = scalar_select %p70, %s71, %s72
      %p76 = pneg %p70
      %p77 = scmp.eq.s32.totalorder %s21, 1
      %p78 = por %p76, %p77
      %p79 = scmp.ne.s32.totalorder %s71, %s74
      %p80 = scmp.eq.s32.totalorder %s21, 0
      %p81 = por %p79, %p80
      %p82 = scmp.ne.s32.totalorder %s71, %s74
      %p83 = scmp.eq.s32.totalorder %s26, 1
      %p84 = por %p82, %p83
      %p85 = scmp.ne.s32.totalorder %s74, %s75
      %p86 = scmp.eq.s32.totalorder %s26, 0
      %p87 = por %p85, %p86
      %p88 = scmp.ne.s32.totalorder %s74, %s75
      %p89 = scmp.eq.s32.totalorder %s27, 1
      %p90 = por %p88, %p89
      %p92 = scmp.ne.s32.totalorder %s75, %s91
      %p93 = scmp.eq.s32.totalorder %s27, 0
      %p94 = por %p92, %p93
      %s95 = ssub.s32 %s28, %s40
      %s96 = ssub.s32 %s29, %s36
      %s97 = sor.u32 %s95, %s96
      %p98 = scmp.eq.s32.totalorder %s97, 0
      %s100 = sadd.s32 %s99, 1
      %s101 = scalar_select %p98, %s99, %s100
      %p104 = pneg %p98
      %p105 = scmp.eq.s32.totalorder %s21, 1
      %p106 = por %p104, %p105
      %p107 = scmp.ne.s32.totalorder %s99, %s102
      %p108 = scmp.eq.s32.totalorder %s21, 0
      %p109 = por %p107, %p108
      %p110 = scmp.ne.s32.totalorder %s99, %s102
      %p111 = scmp.eq.s32.totalorder %s26, 1
      %p112 = por %p110, %p111
      %p113 = scmp.ne.s32.totalorder %s102, %s103
      %p114 = scmp.eq.s32.totalorder %s26, 0
      %p115 = por %p113, %p114
      %p116 = scmp.ne.s32.totalorder %s102, %s103
      %p117 = scmp.eq.s32.totalorder %s27, 1
      %p118 = por %p116, %p117
      %p120 = scmp.ne.s32.totalorder %s103, %s119
      %p121 = scmp.eq.s32.totalorder %s27, 0
      %p122 = por %p120, %p121
      %s123 = ssub.s32 %s28, %s40
      %p124 = scmp.eq.s32.totalorder %s123, 0
      %s126 = sadd.s32 %s125, 1
      %s127 = scalar_select %p124, %s125, %s126
      %p130 = pneg %p124
      %p131 = scmp.eq.s32.totalorder %s21, 1
      %p132 = por %p130, %p131
      %p133 = scmp.ne.s32.totalorder %s125, %s128
      %p134 = scmp.eq.s32.totalorder %s21, 0
      %p135 = por %p133, %p134
      %p136 = scmp.ne.s32.totalorder %s125, %s128
      %p137 = scmp.eq.s32.totalorder %s26, 1
      %p138 = por %p136, %p137
      %p139 = scmp.ne.s32.totalorder %s128, %s129
      %p140 = scmp.eq.s32.totalorder %s26, 0
      %p141 = por %p139, %p140
      %p142 = scmp.ne.s32.totalorder %s128, %s129
      %p143 = scmp.eq.s32.totalorder %s27, 1
      %p144 = por %p142, %p143
      %p146 = scmp.ne.s32.totalorder %s129, %s145
      %p147 = scmp.eq.s32.totalorder %s27, 0
      %p148 = por %p146, %p147
      %s149 = ssub.s32 %s28, %s40
      %p150 = scmp.eq.s32.totalorder %s149, 0
      %s152 = sadd.s32 %s151, 1
      %s153 = scalar_select %p150, %s151, %s152
      %p156 = pneg %p150
      %p157 = scmp.eq.s32.totalorder %s21, 1
      %p158 = por %p156, %p157
      %p159 = scmp.ne.s32.totalorder %s151, %s154
      %p160 = scmp.eq.s32.totalorder %s21, 0
      %p161 = por %p159, %p160
      %p162 = scmp.ne.s32.totalorder %s151, %s154
      %p163 = scmp.eq.s32.totalorder %s26, 1
      %p164 = por %p162, %p163
      %p165 = scmp.ne.s32.totalorder %s154, %s155
      %p166 = scmp.eq.s32.totalorder %s26, 0
      %p167 = por %p165, %p166
      %p168 = scmp.ne.s32.totalorder %s154, %s155
      %p169 = scmp.eq.s32.totalorder %s27, 1
      %p170 = por %p168, %p169
      %p172 = scmp.ne.s32.totalorder %s155, %s171
      %p173 = scmp.eq.s32.totalorder %s27, 0
      %p174 = por %p172, %p173
      %s176 = sadd.s32 %s175, 1
      %p179 = scmp.eq.s32.totalorder %s21, 1
      %p180 = scmp.ne.s32.totalorder %s175, %s177
      %p181 = scmp.eq.s32.totalorder %s21, 0
      %p182 = por %p180, %p181
      %p183 = scmp.ne.s32.totalorder %s175, %s177
      %p184 = scmp.eq.s32.totalorder %s26, 1
      %p185 = por %p183, %p184
      %p186 = scmp.ne.s32.totalorder %s177, %s178
      %p187 = scmp.eq.s32.totalorder %s26, 0
      %p188 = por %p186, %p187
      %p189 = scmp.ne.s32.totalorder %s177, %s178
      %p190 = scmp.eq.s32.totalorder %s27, 1
      %p191 = por %p189, %p190
      %p193 = scmp.ne.s32.totalorder %s178, %s192
      %p194 = scmp.eq.s32.totalorder %s27, 0
      %p195 = por %p193, %p194
      %s196 = ssub.s32 %s28, %s40
      %s197 = ssub.s32 %s29, %s36
      %s198 = sor.u32 %s196, %s197
      %p199 = scmp.eq.s32.totalorder %s198, 0
      %s201 = sadd.s32 %s200, 1
      %s202 = scalar_select %p199, %s200, %s201
      %p205 = pneg %p199
      %p206 = scmp.eq.s32.totalorder %s21, 1
      %p207 = por %p205, %p206
      %p208 = scmp.ne.s32.totalorder %s200, %s203
      %p209 = scmp.eq.s32.totalorder %s21, 0
      %p210 = por %p208, %p209
      %p211 = scmp.ne.s32.totalorder %s200, %s203
      %p212 = scmp.eq.s32.totalorder %s26, 1
      %p213 = por %p211, %p212
      %p214 = scmp.ne.s32.totalorder %s203, %s204
      %p215 = scmp.eq.s32.totalorder %s26, 0
      %p216 = por %p214, %p215
      %p217 = scmp.ne.s32.totalorder %s203, %s204
      %p218 = scmp.eq.s32.totalorder %s27, 1
      %p219 = por %p217, %p218
      %p221 = scmp.ne.s32.totalorder %s204, %s220
      %p222 = scmp.eq.s32.totalorder %s27, 0
      %p223 = por %p221, %p222
      %s224 = ssub.s32 %s28, %s40
      %s225 = ssub.s32 %s29, %s36
      %s226 = sor.u32 %s224, %s225
      %p227 = scmp.eq.s32.totalorder %s226, 0
      %s229 = sadd.s32 %s228, 1
      %s230 = scalar_select %p227, %s228, %s229
      %p233 = pneg %p227
      %p234 = scmp.eq.s32.totalorder %s21, 1
      %p235 = por %p233, %p234
      %p236 = scmp.ne.s32.totalorder %s228, %s231
      %p237 = scmp.eq.s32.totalorder %s21, 0
      %p238 = por %p236, %p237
      %p239 = scmp.ne.s32.totalorder %s228, %s231
      %p240 = scmp.eq.s32.totalorder %s26, 1
      %p241 = por %p239, %p240
      %p242 = scmp.ne.s32.totalorder %s231, %s232
      %p243 = scmp.eq.s32.totalorder %s26, 0
      %p244 = por %p242, %p243
      %p245 = scmp.ne.s32.totalorder %s231, %s232
      %p246 = scmp.eq.s32.totalorder %s27, 1
      %p247 = por %p245, %p246
      %p249 = scmp.ne.s32.totalorder %s232, %s248
      %p250 = scmp.eq.s32.totalorder %s27, 0
      %p251 = por %p249, %p250
      %p252 = scmp.le.s32.totalorder 1, %s21
      %p253 = scmp.lt.s32.totalorder %s21, 3
      %p254 = pnand %p252, %p253
      %p255 = pneg %p254
      // Predicated region
      $region9: #{tpu_custom_call.1} parent=5 // pred_check
        _
      $region10: #{tpu_custom_call.1} parent=5 // pred_check_branch
        %257 = sbr.rel (%p254) target = $region12
      $region11: #{tpu_custom_call.1} parent=5 // pred_region
        %s258 = ssub.s32 %s21, 1
        // Predicated region
        $region13: #{tpu_custom_call.1} parent=11 // pred_check
          %p259 = pneg %p188
        $region14: #{tpu_custom_call.1} parent=11 // pred_check_branch
          %261 = sbr.rel (%p259) target = $region16
        $region15: #{tpu_custom_call.1} parent=11 // pred_region
          _
        $region16: #{tpu_custom_call.1} parent=11 // pred_fallthru
          _
      $region12: #{tpu_custom_call.1} parent=5 // pred_fallthru
        _
      %p262 = scmp.lt.s32.totalorder %s21, 2
      // Predicated region
      $region17: #{tpu_custom_call.1} parent=5 // pred_check
        %p263 = pneg %p262
      $region18: #{tpu_custom_call.1} parent=5 // pred_check_branch
        %265 = sbr.rel (%p263) target = $region20
      $region19: #{tpu_custom_call.1} parent=5 // pred_region
        // Predicated region
        $region21: #{tpu_custom_call.1} parent=19 // pred_check
          %p266 = pneg %p55
        $region22: #{tpu_custom_call.1} parent=19 // pred_check_branch
          %268 = sbr.rel (%p266) target = $region24
        $region23: #{tpu_custom_call.1} parent=19 // pred_region
          %s269 = smul.u32 32, %s29
          %p270 = scmp.lt.s32.totalorder %s28, 1
          %s271 = scalar_select %p270, %s28, 1
          %p272 = scmp.lt.s32.totalorder %s269, 31
          %s273 = scalar_select %p272, %s269, 31
          %s274 = smul.addr %s271, 32
          %s275 = sadd.s32 %s273, %s274
          %s276 = smul.addr %s275, 8
          %s277 = scalar_lea.vmem %s0, %s276
          %s278 = smul.u32 32, %s29
        $region24: #{tpu_custom_call.1} parent=19 // pred_fallthru
          _
        // Predicated region
        $region25: #{tpu_custom_call.1} parent=19 // pred_check
          %p279 = pneg %p81
        $region26: #{tpu_custom_call.1} parent=19 // pred_check_branch
          %281 = sbr.rel (%p279) target = $region28
        $region27: #{tpu_custom_call.1} parent=19 // pred_region
          %p282 = scmp.lt.s32.totalorder %s28, 1
          %s283 = scalar_select %p282, %s28, 1
          %s284 = smul.addr %s283, 4
          %s285 = smul.addr %s284, 8
          %s286 = scalar_lea.vmem %s1, %s285
        $region28: #{tpu_custom_call.1} parent=19 // pred_fallthru
          _
        // Predicated region
        $region29: #{tpu_custom_call.1} parent=19 // pred_check
          %p287 = pneg %p109
        $region30: #{tpu_custom_call.1} parent=19 // pred_check_branch
          %289 = sbr.rel (%p287) target = $region32
        $region31: #{tpu_custom_call.1} parent=19 // pred_region
          %s290 = smul.u32 2, %s29
          %p291 = scmp.lt.s32.totalorder %s28, 1
          %s292 = scalar_select %p291, %s28, 1
          %p293 = scmp.lt.s32.totalorder %s290, 1
          %s294 = scalar_select %p293, %s290, 1
          %s295 = smul.addr %s292, 4
          %s296 = sadd.s32 %s294, %s295
          %s297 = smul.addr %s296, 8
          %s298 = scalar_lea.vmem %s2, %s297
          %s299 = smul.u32 2, %s29
        $region32: #{tpu_custom_call.1} parent=19 // pred_fallthru
          _
        // Predicated region
        $region33: #{tpu_custom_call.1} parent=19 // pred_check
          %p300 = pneg %p135
        $region34: #{tpu_custom_call.1} parent=19 // pred_check_branch
          %302 = sbr.rel (%p300) target = $region36
        $region35: #{tpu_custom_call.1} parent=19 // pred_region
          %p303 = scmp.lt.s32.totalorder %s28, 1
          %s304 = scalar_select %p303, %s28, 1
          %s305 = smul.addr %s304, 4
          %s306 = smul.addr %s305, 8
          %s307 = scalar_lea.vmem %s3, %s306
        $region36: #{tpu_custom_call.1} parent=19 // pred_fallthru
          _
        // Predicated region
        $region37: #{tpu_custom_call.1} parent=19 // pred_check
          %p308 = pneg %p161
        $region38: #{tpu_custom_call.1} parent=19 // pred_check_branch
          %310 = sbr.rel (%p308) target = $region40
        $region39: #{tpu_custom_call.1} parent=19 // pred_region
          %p311 = scmp.lt.s32.totalorder %s28, 1
          %s312 = scalar_select %p311, %s28, 1
          %s313 = smul.addr %s312, 2
          %s314 = scalar_lea.vmem %s4, %s313
        $region40: #{tpu_custom_call.1} parent=19 // pred_fallthru
          _
      $region20: #{tpu_custom_call.1} parent=5 // pred_fallthru
        _
      %p315 = scmp.le.s32.totalorder 1, %s21
      %p316 = scmp.lt.s32.totalorder %s21, 3
      %p317 = pnand %p315, %p316
      %p318 = pneg %p317
      // Predicated region
      $region41: #{tpu_custom_call.1} parent=5 // pred_check
        _
      $region42: #{tpu_custom_call.1} parent=5 // pred_check_branch
        %320 = sbr.rel (%p317) target = $region44
      $region43: #{tpu_custom_call.1} parent=5 // pred_region
        %s321 = ssub.s32 %s21, 1
        %s322 = smul.u32 32, %s31
        %p323 = scmp.lt.s32.totalorder %s30, 1
        %s324 = scalar_select %p323, %s30, 1
        %p325 = scmp.lt.s32.totalorder %s322, 31
        %s326 = scalar_select %p325, %s322, 31
        %s327 = smul.addr %s324, 32
        %s328 = sadd.s32 %s326, %s327
        %s329 = smul.addr %s328, 8
        %s330 = scalar_lea.vmem %s0, %s329
        %p331 = pneg %p61
        %p332 = pneg %p58
        %p333 = scmp.lt.s32.totalorder %s30, 1
        %s334 = scalar_select %p333, %s30, 1
        %s335 = smul.addr %s334, 4
        %s336 = smul.addr %s335, 8
        %s337 = scalar_lea.vmem %s1, %s336
        %p338 = pneg %p87
        %p339 = pneg %p84
        %s340 = smul.u32 2, %s31
        %p341 = scmp.lt.s32.totalorder %s30, 1
        %s342 = scalar_select %p341, %s30, 1
        %p343 = scmp.lt.s32.totalorder %s340, 1
        %s344 = scalar_select %p343, %s340, 1
        %s345 = smul.addr %s342, 4
        %s346 = sadd.s32 %s344, %s345
        %s347 = smul.addr %s346, 8
        %s348 = scalar_lea.vmem %s2, %s347
        %p349 = pneg %p115
        %p350 = pneg %p112
        %p351 = scmp.lt.s32.totalorder %s30, 1
        %s352 = scalar_select %p351, %s30, 1
        %s353 = smul.addr %s352, 4
        %s354 = smul.addr %s353, 8
        %s355 = scalar_lea.vmem %s3, %s354
        %p356 = pneg %p141
        %p357 = pneg %p138
        %p358 = scmp.lt.s32.totalorder %s30, 1
        %s359 = scalar_select %p358, %s30, 1
        %s360 = smul.addr %s359, 2
        %s361 = scalar_lea.vmem %s4, %s360
        %p362 = pneg %p167
        %p363 = pneg %p164
        %p364 = pneg %p188
        %p365 = pneg %p185
        %p366 = pneg %p216
        %p367 = pneg %p213
        %s368 = sand.u32 %s203, 1
        %s369 = scalar_lea.sflag [#allocation4], %s368
        %s370 = sand.u32 %s203, 1
        %s371 = smul.addr %s370, 32
        %s372 = scalar_lea.vmem [#allocation3], %s371
        %p373 = pneg %p244
        %p374 = pneg %p241
        %s375 = sand.u32 %s231, 1
        %s376 = scalar_lea.sflag [#allocation6], %s375
        %s377 = sand.u32 %s231, 1
        %s378 = smul.addr %s377, 512
        %s379 = scalar_lea.vmem [#allocation5], %s378
        %s380 = smul.u32 32, %s31
        %p381 = scmp.lt.s32.totalorder %s30, 1
        %s382 = scalar_select %p381, %s30, 1
        %p383 = scmp.lt.s32.totalorder %s380, 31
        %s384 = scalar_select %p383, %s380, 31
        %s385 = smul.addr %s382, 32
        %s386 = sadd.s32 %s384, %s385
        %s387 = smul.addr %s386, 8
        %s388 = scalar_lea.vmem %s0, %s387
        %s389 = smul.u32 32, %s31
        %p390 = scmp.lt.s32.totalorder %s30, 1
        %s391 = scalar_select %p390, %s30, 1
        %s392 = smul.addr %s391, 4
        %s393 = smul.addr %s392, 8
        %s394 = scalar_lea.vmem %s1, %s393
        %s395 = smul.u32 2, %s31
        %p396 = scmp.lt.s32.totalorder %s30, 1
        %s397 = scalar_select %p396, %s30, 1
        %p398 = scmp.lt.s32.totalorder %s395, 1
        %s399 = scalar_select %p398, %s395, 1
        %s400 = smul.addr %s397, 4
        %s401 = sadd.s32 %s399, %s400
        %s402 = smul.addr %s401, 8
        %s403 = scalar_lea.vmem %s2, %s402
        %s404 = smul.u32 2, %s31
        %p405 = scmp.lt.s32.totalorder %s30, 1
        %s406 = scalar_select %p405, %s30, 1
        %s407 = smul.addr %s406, 4
        %s408 = smul.addr %s407, 8
        %s409 = scalar_lea.vmem %s3, %s408
        %p410 = scmp.lt.s32.totalorder %s30, 1
        %s411 = scalar_select %p410, %s30, 1
        %s412 = smul.addr %s411, 2
        %s413 = scalar_lea.vmem %s4, %s412
        %s414 = smul.u32 2, %s31
        %s415 = smul.u32 32, %s31
        %v416 = vld [vmem:[%s388] sm:$0xff]
        %v417 = vld [vmem:[%s388 + $0x8] sm:$0xff]
        %v418 = vld [vmem:[%s388 + $0x10] sm:$0xff]
        %v419 = vld [vmem:[%s388 + $0x18] sm:$0xff]
        %v420 = vld [vmem:[%s388 + $0x20] sm:$0xff]
        %v421 = vld [vmem:[%s388 + $0x28] sm:$0xff]
        %v422 = vld [vmem:[%s388 + $0x30] sm:$0xff]
        %v423 = vld [vmem:[%s388 + $0x38] sm:$0xff]
        %v424 = vld [vmem:[%s388 + $0x40] sm:$0xff]
        %v425 = vld [vmem:[%s388 + $0x48] sm:$0xff]
        %v426 = vld [vmem:[%s388 + $0x50] sm:$0xff]
        %v427 = vld [vmem:[%s388 + $0x58] sm:$0xff]
        %v428 = vld [vmem:[%s388 + $0x60] sm:$0xff]
        %v429 = vld [vmem:[%s388 + $0x68] sm:$0xff]
        %v430 = vld [vmem:[%s388 + $0x70] sm:$0xff]
        %v431 = vld [vmem:[%s388 + $0x78] sm:$0xff]
        %v432 = vld [vmem:[%s388 + $0x80] sm:$0xff]
        %v433 = vld [vmem:[%s388 + $0x88] sm:$0xff]
        %v434 = vld [vmem:[%s388 + $0x90] sm:$0xff]
        %v435 = vld [vmem:[%s388 + $0x98] sm:$0xff]
        %v436 = vld [vmem:[%s388 + $0xa0] sm:$0xff]
        %v437 = vld [vmem:[%s388 + $0xa8] sm:$0xff]
        %v438 = vld [vmem:[%s388 + $0xb0] sm:$0xff]
        %v439 = vld [vmem:[%s388 + $0xb8] sm:$0xff]
        %v440 = vld [vmem:[%s388 + $0xc0] sm:$0xff]
        %v441 = vld [vmem:[%s388 + $0xc8] sm:$0xff]
        %v442 = vld [vmem:[%s388 + $0xd0] sm:$0xff]
        %v443 = vld [vmem:[%s388 + $0xd8] sm:$0xff]
        %v444 = vld [vmem:[%s388 + $0xe0] sm:$0xff]
        %v445 = vld [vmem:[%s388 + $0xe8] sm:$0xff]
        %v446 = vld [vmem:[%s388 + $0xf0] sm:$0xff]
        %v447 = vld [vmem:[%s388 + $0xf8] sm:$0xff]
        %v448 = vld [vmem:[%s394] sm:$0xff]
        %v449 = vld [vmem:[%s394 + $0x8] sm:$0xff]
        %v450 = vld [vmem:[%s394 + $0x10] sm:$0xff]
        %v451 = vld [vmem:[%s394 + $0x18] sm:$0xff]
        %v452 = vld [vmem:[%s409] sm:$0xff]
        %v453 = vld [vmem:[%s409 + $0x8] sm:$0xff]
        %v454 = vld [vmem:[%s409 + $0x10] sm:$0xff]
        %v455 = vld [vmem:[%s409 + $0x18] sm:$0xff]
        %v456 = vld [vmem:[%s413] sm:$0x3]
        %v458 = vlaneseq
        %v459 = vshrl.u32 %v458, 7
        %v460 = vsub.s32 0, %v459
        %v461 = vrot.slane %v456, %v460
        %v462 = vlaneseq
        %v463 = vshrl.u32 %v462, 7
        %v464 = vsub.s32 1, %v463
        %v465 = vrot.slane %v456, %v464
        %vm468 = vcmask 130048
        %v470 = vsel %vm468, %v416, 0
        %v473 = vsel %vm468, %v417, 0
        %v476 = vsel %vm468, %v418, 0
        %v479 = vsel %vm468, %v419, 0
        %v482 = vsel %vm468, %v420, 0
        %v485 = vsel %vm468, %v421, 0
        %v488 = vsel %vm468, %v422, 0
        %v491 = vsel %vm468, %v423, 0
        %v494 = vsel %vm468, %v424, 0
        %v497 = vsel %vm468, %v425, 0
        %v500 = vsel %vm468, %v426, 0
        %v503 = vsel %vm468, %v427, 0
        %v506 = vsel %vm468, %v428, 0
        %v509 = vsel %vm468, %v429, 0
        %v512 = vsel %vm468, %v430, 0
        %v515 = vsel %vm468, %v431, 0
        %v518 = vsel %vm468, %v432, 0
        %v521 = vsel %vm468, %v433, 0
        %v524 = vsel %vm468, %v434, 0
        %v527 = vsel %vm468, %v435, 0
        %v530 = vsel %vm468, %v436, 0
        %v533 = vsel %vm468, %v437, 0
        %v536 = vsel %vm468, %v438, 0
        %v539 = vsel %vm468, %v439, 0
        %v542 = vsel %vm468, %v440, 0
        %v545 = vsel %vm468, %v441, 0
        %v548 = vsel %vm468, %v442, 0
        %v551 = vsel %vm468, %v443, 0
        %v554 = vsel %vm468, %v444, 0
        %v557 = vsel %vm468, %v445, 0
        %v560 = vsel %vm468, %v446, 0
        %v563 = vsel %vm468, %v447, 0
        %565 = vmatprep.subr.mxu0 0.0
        %566 = vmatpush1.msra.mxu0 0.0
        %567 = vmatprep.subr.mxu0 0.0
        %568 = vmatpush1.msra.mxu0 0.0
        %569 = vmatprep.subr.mxu0 0.0
        %570 = vmatpush1.msra.mxu0 0.0
        %571 = vmatprep.subr.mxu0 0.0
        %572 = vmatpush1.msra.mxu0 0.0
        %573 = vmatprep.subr.mxu0 0.0
        %574 = vmatpush1.msra.mxu0 0.0
        %575 = vmatprep.subr.mxu0 0.0
        %576 = vmatpush1.msra.mxu0 0.0
        %577 = vmatprep.subr.mxu0 0.0
        %578 = vmatpush1.msra.mxu0 0.0
        %579 = vmatprep.subr.mxu0 0.0
        %580 = vmatpush1.msra.mxu0 0.0
        %581 = vmatprep.subr.mxu0 0.0
        %582 = vmatpush1.msra.mxu0 0.0
        %583 = vmatprep.subr.mxu0 0.0
        %584 = vmatpush1.msra.mxu0 0.0
        %585 = vmatprep.subr.mxu0 0.0
        %586 = vmatpush1.msra.mxu0 0.0
        %587 = vmatprep.subr.mxu0 0.0
        %588 = vmatpush1.msra.mxu0 0.0
        %589 = vmatprep.subr.mxu0 0.0
        %590 = vmatpush1.msra.mxu0 0.0
        %591 = vmatprep.subr.mxu0 0.0
        %592 = vmatpush1.msra.mxu0 0.0
        %593 = vmatprep.subr.mxu0 %v451
        %594 = vmatpush1.msra.mxu0 %v450
        %595 = vmatprep.subr.mxu0 %v449
        %596 = vmatpush1.msra.mxu0 %v448
        %597 = vmatprep.subr.mxu0 0.0
        %598 = vmatpush2.msra.mxu0 0.0
        %599 = vmatprep.subr.mxu0 0.0
        %600 = vmatpush2.msra.mxu0 0.0
        %601 = vmatprep.subr.mxu0 0.0
        %602 = vmatpush2.msra.mxu0 0.0
        %603 = vmatprep.subr.mxu0 0.0
        %604 = vmatpush2.msra.mxu0 0.0
        %605 = vmatprep.subr.mxu0 0.0
        %606 = vmatpush2.msra.mxu0 0.0
        %607 = vmatprep.subr.mxu0 0.0
        %608 = vmatpush2.msra.mxu0 0.0
        %609 = vmatprep.subr.mxu0 0.0
        %610 = vmatpush2.msra.mxu0 0.0
        %611 = vmatprep.subr.mxu0 0.0
        %612 = vmatpush2.msra.mxu0 0.0
        %613 = vmatprep.subr.mxu0 0.0
        %614 = vmatpush2.msra.mxu0 0.0
        %615 = vmatprep.subr.mxu0 0.0
        %616 = vmatpush2.msra.mxu0 0.0
        %617 = vmatprep.subr.mxu0 0.0
        %618 = vmatpush2.msra.mxu0 0.0
        %619 = vmatprep.subr.mxu0 0.0
        %620 = vmatpush2.msra.mxu0 0.0
        %621 = vmatprep.subr.mxu0 0.0
        %622 = vmatpush2.msra.mxu0 0.0
        %623 = vmatprep.subr.mxu0 0.0
        %624 = vmatpush2.msra.mxu0 0.0
        %625 = vmatprep.subr.mxu0 0.0
        %626 = vmatpush2.msra.mxu0 0.0
        %627 = vmatprep.subr.mxu0 0.0
        %628 = vmatpush2.msra.mxu0 0.0
        %629 = vmatprep.mubr.f32.mxu0 0.0
        %630 = vmatmul.mubr.f32.gmra.mxu0 %v470
        %v631 = vpop.f32.mrf.mxu0
        %v632 = vadd.f32 %v461, %v631
        %v633 = vpop.f32.mrf.mxu0
        %v634 = vadd.f32 %v465, %v633
        %635 = vmatprep.mubr.f32.mxu0 0.0
        %636 = vmatmul.mubr.f32.gmra.mxu0 %v473
        %v637 = vpop.f32.mrf.mxu0
        %v638 = vadd.f32 %v461, %v637
        %v639 = vpop.f32.mrf.mxu0
        %v640 = vadd.f32 %v465, %v639
        %641 = vmatprep.mubr.f32.mxu0 0.0
        %642 = vmatmul.mubr.f32.gmra.mxu0 %v476
        %v643 = vpop.f32.mrf.mxu0
        %v644 = vadd.f32 %v461, %v643
        %v645 = vpop.f32.mrf.mxu0
        %v646 = vadd.f32 %v465, %v645
        %647 = vmatprep.mubr.f32.mxu0 0.0
        %648 = vmatmul.mubr.f32.gmra.mxu0 %v479
        %v649 = vpop.f32.mrf.mxu0
        %v650 = vadd.f32 %v461, %v649
        %v651 = vpop.f32.mrf.mxu0
        %v652 = vadd.f32 %v465, %v651
        %653 = vmatprep.mubr.f32.mxu0 0.0
        %654 = vmatmul.mubr.f32.gmra.mxu0 %v482
        %v655 = vpop.f32.mrf.mxu0
        %v656 = vadd.f32 %v461, %v655
        %v657 = vpop.f32.mrf.mxu0
        %v658 = vadd.f32 %v465, %v657
        %659 = vmatprep.mubr.f32.mxu0 0.0
        %660 = vmatmul.mubr.f32.gmra.mxu0 %v485
        %v661 = vpop.f32.mrf.mxu0
        %v662 = vadd.f32 %v461, %v661
        %v663 = vpop.f32.mrf.mxu0
        %v664 = vadd.f32 %v465, %v663
        %665 = vmatprep.mubr.f32.mxu0 0.0
        %666 = vmatmul.mubr.f32.gmra.mxu0 %v488
        %v667 = vpop.f32.mrf.mxu0
        %v668 = vadd.f32 %v461, %v667
        %v669 = vpop.f32.mrf.mxu0
        %v670 = vadd.f32 %v465, %v669
        %671 = vmatprep.mubr.f32.mxu0 0.0
        %672 = vmatmul.mubr.f32.gmra.mxu0 %v491
        %v673 = vpop.f32.mrf.mxu0
        %v674 = vadd.f32 %v461, %v673
        %v675 = vpop.f32.mrf.mxu0
        %v676 = vadd.f32 %v465, %v675
        %677 = vmatprep.mubr.f32.mxu0 0.0
        %678 = vmatmul.mubr.f32.gmra.mxu0 %v494
        %v679 = vpop.f32.mrf.mxu0
        %v680 = vadd.f32 %v461, %v679
        %v681 = vpop.f32.mrf.mxu0
        %v682 = vadd.f32 %v465, %v681
        %683 = vmatprep.mubr.f32.mxu0 0.0
        %684 = vmatmul.mubr.f32.gmra.mxu0 %v497
        %v685 = vpop.f32.mrf.mxu0
        %v686 = vadd.f32 %v461, %v685
        %v687 = vpop.f32.mrf.mxu0
        %v688 = vadd.f32 %v465, %v687
        %689 = vmatprep.mubr.f32.mxu0 0.0
        %690 = vmatmul.mubr.f32.gmra.mxu0 %v500
        %v691 = vpop.f32.mrf.mxu0
        %v692 = vadd.f32 %v461, %v691
        %v693 = vpop.f32.mrf.mxu0
        %v694 = vadd.f32 %v465, %v693
        %695 = vmatprep.mubr.f32.mxu0 0.0
        %696 = vmatmul.mubr.f32.gmra.mxu0 %v503
        %v697 = vpop.f32.mrf.mxu0
        %v698 = vadd.f32 %v461, %v697
        %v699 = vpop.f32.mrf.mxu0
        %v700 = vadd.f32 %v465, %v699
        %701 = vmatprep.mubr.f32.mxu0 0.0
        %702 = vmatmul.mubr.f32.gmra.mxu0 %v506
        %v703 = vpop.f32.mrf.mxu0
        %v704 = vadd.f32 %v461, %v703
        %v705 = vpop.f32.mrf.mxu0
        %v706 = vadd.f32 %v465, %v705
        %707 = vmatprep.mubr.f32.mxu0 0.0
        %708 = vmatmul.mubr.f32.gmra.mxu0 %v509
        %v709 = vpop.f32.mrf.mxu0
        %v710 = vadd.f32 %v461, %v709
        %v711 = vpop.f32.mrf.mxu0
        %v712 = vadd.f32 %v465, %v711
        %713 = vmatprep.mubr.f32.mxu0 0.0
        %714 = vmatmul.mubr.f32.gmra.mxu0 %v512
        %v715 = vpop.f32.mrf.mxu0
        %v716 = vadd.f32 %v461, %v715
        %v717 = vpop.f32.mrf.mxu0
        %v718 = vadd.f32 %v465, %v717
        %719 = vmatprep.mubr.f32.mxu0 0.0
        %720 = vmatmul.mubr.f32.gmra.mxu0 %v515
        %v721 = vpop.f32.mrf.mxu0
        %v722 = vadd.f32 %v461, %v721
        %v723 = vpop.f32.mrf.mxu0
        %v724 = vadd.f32 %v465, %v723
        %725 = vmatprep.mubr.f32.mxu0 0.0
        %726 = vmatmul.mubr.f32.gmra.mxu0 %v518
        %v727 = vpop.f32.mrf.mxu0
        %v728 = vadd.f32 %v461, %v727
        %v729 = vpop.f32.mrf.mxu0
        %v730 = vadd.f32 %v465, %v729
        %731 = vmatprep.mubr.f32.mxu0 0.0
        %732 = vmatmul.mubr.f32.gmra.mxu0 %v521
        %v733 = vpop.f32.mrf.mxu0
        %v734 = vadd.f32 %v461, %v733
        %v735 = vpop.f32.mrf.mxu0
        %v736 = vadd.f32 %v465, %v735
        %737 = vmatprep.mubr.f32.mxu0 0.0
        %738 = vmatmul.mubr.f32.gmra.mxu0 %v524
        %v739 = vpop.f32.mrf.mxu0
        %v740 = vadd.f32 %v461, %v739
        %v741 = vpop.f32.mrf.mxu0
        %v742 = vadd.f32 %v465, %v741
        %743 = vmatprep.mubr.f32.mxu0 0.0
        %744 = vmatmul.mubr.f32.gmra.mxu0 %v527
        %v745 = vpop.f32.mrf.mxu0
        %v746 = vadd.f32 %v461, %v745
        %v747 = vpop.f32.mrf.mxu0
        %v748 = vadd.f32 %v465, %v747
        %749 = vmatprep.mubr.f32.mxu0 0.0
        %750 = vmatmul.mubr.f32.gmra.mxu0 %v530
        %v751 = vpop.f32.mrf.mxu0
        %v752 = vadd.f32 %v461, %v751
        %v753 = vpop.f32.mrf.mxu0
        %v754 = vadd.f32 %v465, %v753
        %755 = vmatprep.mubr.f32.mxu0 0.0
        %756 = vmatmul.mubr.f32.gmra.mxu0 %v533
        %v757 = vpop.f32.mrf.mxu0
        %v758 = vadd.f32 %v461, %v757
        %v759 = vpop.f32.mrf.mxu0
        %v760 = vadd.f32 %v465, %v759
        %761 = vmatprep.mubr.f32.mxu0 0.0
        %762 = vmatmul.mubr.f32.gmra.mxu0 %v536
        %v763 = vpop.f32.mrf.mxu0
        %v764 = vadd.f32 %v461, %v763
        %v765 = vpop.f32.mrf.mxu0
        %v766 = vadd.f32 %v465, %v765
        %767 = vmatprep.mubr.f32.mxu0 0.0
        %768 = vmatmul.mubr.f32.gmra.mxu0 %v539
        %v769 = vpop.f32.mrf.mxu0
        %v770 = vadd.f32 %v461, %v769
        %v771 = vpop.f32.mrf.mxu0
        %v772 = vadd.f32 %v465, %v771
        %773 = vmatprep.mubr.f32.mxu0 0.0
        %774 = vmatmul.mubr.f32.gmra.mxu0 %v542
        %v775 = vpop.f32.mrf.mxu0
        %v776 = vadd.f32 %v461, %v775
        %v777 = vpop.f32.mrf.mxu0
        %v778 = vadd.f32 %v465, %v777
        %779 = vmatprep.mubr.f32.mxu0 0.0
        %780 = vmatmul.mubr.f32.gmra.mxu0 %v545
        %v781 = vpop.f32.mrf.mxu0
        %v782 = vadd.f32 %v461, %v781
        %v783 = vpop.f32.mrf.mxu0
        %v784 = vadd.f32 %v465, %v783
        %785 = vmatprep.mubr.f32.mxu0 0.0
        %786 = vmatmul.mubr.f32.gmra.mxu0 %v548
        %v787 = vpop.f32.mrf.mxu0
        %v788 = vadd.f32 %v461, %v787
        %v789 = vpop.f32.mrf.mxu0
        %v790 = vadd.f32 %v465, %v789
        %791 = vmatprep.mubr.f32.mxu0 0.0
        %792 = vmatmul.mubr.f32.gmra.mxu0 %v551
        %v793 = vpop.f32.mrf.mxu0
        %v794 = vadd.f32 %v461, %v793
        %v795 = vpop.f32.mrf.mxu0
        %v796 = vadd.f32 %v465, %v795
        %797 = vmatprep.mubr.f32.mxu0 0.0
        %798 = vmatmul.mubr.f32.gmra.mxu0 %v554
        %v799 = vpop.f32.mrf.mxu0
        %v800 = vadd.f32 %v461, %v799
        %v801 = vpop.f32.mrf.mxu0
        %v802 = vadd.f32 %v465, %v801
        %803 = vmatprep.mubr.f32.mxu0 0.0
        %804 = vmatmul.mubr.f32.gmra.mxu0 %v557
        %v805 = vpop.f32.mrf.mxu0
        %v806 = vadd.f32 %v461, %v805
        %v807 = vpop.f32.mrf.mxu0
        %v808 = vadd.f32 %v465, %v807
        %809 = vmatprep.mubr.f32.mxu0 0.0
        %810 = vmatmul.mubr.f32.gmra.mxu0 %v560
        %v811 = vpop.f32.mrf.mxu0
        %v812 = vadd.f32 %v461, %v811
        %v813 = vpop.f32.mrf.mxu0
        %v814 = vadd.f32 %v465, %v813
        %815 = vmatprep.mubr.f32.mxu0 0.0
        %816 = vmatmul.mubr.f32.gmra.mxu0 %v563
        %v817 = vpop.f32.mrf.mxu0
        %v818 = vadd.f32 %v461, %v817
        %v819 = vpop.f32.mrf.mxu0
        %v820 = vadd.f32 %v465, %v819
        %821 = vdwg.mxu0
        %v822 = vmax.f32 %v632, %v634
        %823 = vmax.xlane.f32.xlu0 %v822
        %v824 = vpop.xlane.xlu0 %823
        %v825 = vmax.f32 %v638, %v640
        %826 = vmax.xlane.f32.xlu0 %v825
        %v827 = vpop.xlane.xlu0 %826
        %v828 = vmax.f32 %v644, %v646
        %829 = vmax.xlane.f32.xlu0 %v828
        %v830 = vpop.xlane.xlu0 %829
        %v831 = vmax.f32 %v650, %v652
        %832 = vmax.xlane.f32.xlu0 %v831
        %v833 = vpop.xlane.xlu0 %832
        %v834 = vmax.f32 %v656, %v658
        %835 = vmax.xlane.f32.xlu0 %v834
        %v836 = vpop.xlane.xlu0 %835
        %v837 = vmax.f32 %v662, %v664
        %838 = vmax.xlane.f32.xlu0 %v837
        %v839 = vpop.xlane.xlu0 %838
        %v840 = vmax.f32 %v668, %v670
        %841 = vmax.xlane.f32.xlu0 %v840
        %v842 = vpop.xlane.xlu0 %841
        %v843 = vmax.f32 %v674, %v676
        %844 = vmax.xlane.f32.xlu0 %v843
        %v845 = vpop.xlane.xlu0 %844
        %v846 = vmax.f32 %v680, %v682
        %847 = vmax.xlane.f32.xlu0 %v846
        %v848 = vpop.xlane.xlu0 %847
        %v849 = vmax.f32 %v686, %v688
        %850 = vmax.xlane.f32.xlu0 %v849
        %v851 = vpop.xlane.xlu0 %850
        %v852 = vmax.f32 %v692, %v694
        %853 = vmax.xlane.f32.xlu0 %v852
        %v854 = vpop.xlane.xlu0 %853
        %v855 = vmax.f32 %v698, %v700
        %856 = vmax.xlane.f32.xlu0 %v855
        %v857 = vpop.xlane.xlu0 %856
        %v858 = vmax.f32 %v704, %v706
        %859 = vmax.xlane.f32.xlu0 %v858
        %v860 = vpop.xlane.xlu0 %859
        %v861 = vmax.f32 %v710, %v712
        %862 = vmax.xlane.f32.xlu0 %v861
        %v863 = vpop.xlane.xlu0 %862
        %v864 = vmax.f32 %v716, %v718
        %865 = vmax.xlane.f32.xlu0 %v864
        %v866 = vpop.xlane.xlu0 %865
        %v867 = vmax.f32 %v722, %v724
        %868 = vmax.xlane.f32.xlu0 %v867
        %v869 = vpop.xlane.xlu0 %868
        %v870 = vmax.f32 %v728, %v730
        %871 = vmax.xlane.f32.xlu0 %v870
        %v872 = vpop.xlane.xlu0 %871
        %v873 = vmax.f32 %v734, %v736
        %874 = vmax.xlane.f32.xlu0 %v873
        %v875 = vpop.xlane.xlu0 %874
        %v876 = vmax.f32 %v740, %v742
        %877 = vmax.xlane.f32.xlu0 %v876
        %v878 = vpop.xlane.xlu0 %877
        %v879 = vmax.f32 %v746, %v748
        %880 = vmax.xlane.f32.xlu0 %v879
        %v881 = vpop.xlane.xlu0 %880
        %v882 = vmax.f32 %v752, %v754
        %883 = vmax.xlane.f32.xlu0 %v882
        %v884 = vpop.xlane.xlu0 %883
        %v885 = vmax.f32 %v758, %v760
        %886 = vmax.xlane.f32.xlu0 %v885
        %v887 = vpop.xlane.xlu0 %886
        %v888 = vmax.f32 %v764, %v766
        %889 = vmax.xlane.f32.xlu0 %v888
        %v890 = vpop.xlane.xlu0 %889
        %v891 = vmax.f32 %v770, %v772
        %892 = vmax.xlane.f32.xlu0 %v891
        %v893 = vpop.xlane.xlu0 %892
        %v894 = vmax.f32 %v776, %v778
        %895 = vmax.xlane.f32.xlu0 %v894
        %v896 = vpop.xlane.xlu0 %895
        %v897 = vmax.f32 %v782, %v784
        %898 = vmax.xlane.f32.xlu0 %v897
        %v899 = vpop.xlane.xlu0 %898
        %v900 = vmax.f32 %v788, %v790
        %901 = vmax.xlane.f32.xlu0 %v900
        %v902 = vpop.xlane.xlu0 %901
        %v903 = vmax.f32 %v794, %v796
        %904 = vmax.xlane.f32.xlu0 %v903
        %v905 = vpop.xlane.xlu0 %904
        %v906 = vmax.f32 %v800, %v802
        %907 = vmax.xlane.f32.xlu0 %v906
        %v908 = vpop.xlane.xlu0 %907
        %v909 = vmax.f32 %v806, %v808
        %910 = vmax.xlane.f32.xlu0 %v909
        %v911 = vpop.xlane.xlu0 %910
        %v912 = vmax.f32 %v812, %v814
        %913 = vmax.xlane.f32.xlu0 %v912
        %v914 = vpop.xlane.xlu0 %913
        %v915 = vmax.f32 %v818, %v820
        %916 = vmax.xlane.f32.xlu0 %v915
        %v917 = vpop.xlane.xlu0 %916
        %v918 = vsub.f32 %v632, %v824
        %v919 = vsub.f32 %v634, %v824
        %v920 = vsub.f32 %v638, %v827
        %v921 = vsub.f32 %v640, %v827
        %v922 = vsub.f32 %v644, %v830
        %v923 = vsub.f32 %v646, %v830
        %v924 = vsub.f32 %v650, %v833
        %v925 = vsub.f32 %v652, %v833
        %v926 = vsub.f32 %v656, %v836
        %v927 = vsub.f32 %v658, %v836
        %v928 = vsub.f32 %v662, %v839
        %v929 = vsub.f32 %v664, %v839
        %v930 = vsub.f32 %v668, %v842
        %v931 = vsub.f32 %v670, %v842
        %v932 = vsub.f32 %v674, %v845
        %v933 = vsub.f32 %v676, %v845
        %v934 = vsub.f32 %v680, %v848
        %v935 = vsub.f32 %v682, %v848
        %v936 = vsub.f32 %v686, %v851
        %v937 = vsub.f32 %v688, %v851
        %v938 = vsub.f32 %v692, %v854
        %v939 = vsub.f32 %v694, %v854
        %v940 = vsub.f32 %v698, %v857
        %v941 = vsub.f32 %v700, %v857
        %v942 = vsub.f32 %v704, %v860
        %v943 = vsub.f32 %v706, %v860
        %v944 = vsub.f32 %v710, %v863
        %v945 = vsub.f32 %v712, %v863
        %v946 = vsub.f32 %v716, %v866
        %v947 = vsub.f32 %v718, %v866
        %v948 = vsub.f32 %v722, %v869
        %v949 = vsub.f32 %v724, %v869
        %v950 = vsub.f32 %v728, %v872
        %v951 = vsub.f32 %v730, %v872
        %v952 = vsub.f32 %v734, %v875
        %v953 = vsub.f32 %v736, %v875
        %v954 = vsub.f32 %v740, %v878
        %v955 = vsub.f32 %v742, %v878
        %v956 = vsub.f32 %v746, %v881
        %v957 = vsub.f32 %v748, %v881
        %v958 = vsub.f32 %v752, %v884
        %v959 = vsub.f32 %v754, %v884
        %v960 = vsub.f32 %v758, %v887
        %v961 = vsub.f32 %v760, %v887
        %v962 = vsub.f32 %v764, %v890
        %v963 = vsub.f32 %v766, %v890
        %v964 = vsub.f32 %v770, %v893
        %v965 = vsub.f32 %v772, %v893
        %v966 = vsub.f32 %v776, %v896
        %v967 = vsub.f32 %v778, %v896
        %v968 = vsub.f32 %v782, %v899
        %v969 = vsub.f32 %v784, %v899
        %v970 = vsub.f32 %v788, %v902
        %v971 = vsub.f32 %v790, %v902
        %v972 = vsub.f32 %v794, %v905
        %v973 = vsub.f32 %v796, %v905
        %v974 = vsub.f32 %v800, %v908
        %v975 = vsub.f32 %v802, %v908
        %v976 = vsub.f32 %v806, %v911
        %v977 = vsub.f32 %v808, %v911
        %v978 = vsub.f32 %v812, %v914
        %v979 = vsub.f32 %v814, %v914
        %v980 = vsub.f32 %v818, %v917
        %v981 = vsub.f32 %v820, %v917
        %v982 = vmul.f32 %v918, 1.442695
        %v983 = vpow.pop %v982
        %v984 = vmul.f32 %v919, 1.442695
        %v985 = vpow.pop %v984
        %v986 = vmul.f32 %v920, 1.442695
        %v987 = vpow.pop %v986
        %v988 = vmul.f32 %v921, 1.442695
        %v989 = vpow.pop %v988
        %v990 = vmul.f32 %v922, 1.442695
        %v991 = vpow.pop %v990
        %v992 = vmul.f32 %v923, 1.442695
        %v993 = vpow.pop %v992
        %v994 = vmul.f32 %v924, 1.442695
        %v995 = vpow.pop %v994
        %v996 = vmul.f32 %v925, 1.442695
        %v997 = vpow.pop %v996
        %v998 = vmul.f32 %v926, 1.442695
        %v999 = vpow.pop %v998
        %v1000 = vmul.f32 %v927, 1.442695
        %v1001 = vpow.pop %v1000
        %v1002 = vmul.f32 %v928, 1.442695
        %v1003 = vpow.pop %v1002
        %v1004 = vmul.f32 %v929, 1.442695
        %v1005 = vpow.pop %v1004
        %v1006 = vmul.f32 %v930, 1.442695
        %v1007 = vpow.pop %v1006
        %v1008 = vmul.f32 %v931, 1.442695
        %v1009 = vpow.pop %v1008
        %v1010 = vmul.f32 %v932, 1.442695
        %v1011 = vpow.pop %v1010
        %v1012 = vmul.f32 %v933, 1.442695
        %v1013 = vpow.pop %v1012
        %v1014 = vmul.f32 %v934, 1.442695
        %v1015 = vpow.pop %v1014
        %v1016 = vmul.f32 %v935, 1.442695
        %v1017 = vpow.pop %v1016
        %v1018 = vmul.f32 %v936, 1.442695
        %v1019 = vpow.pop %v1018
        %v1020 = vmul.f32 %v937, 1.442695
        %v1021 = vpow.pop %v1020
        %v1022 = vmul.f32 %v938, 1.442695
        %v1023 = vpow.pop %v1022
        %v1024 = vmul.f32 %v939, 1.442695
        %v1025 = vpow.pop %v1024
        %v1026 = vmul.f32 %v940, 1.442695
        %v1027 = vpow.pop %v1026
        %v1028 = vmul.f32 %v941, 1.442695
        %v1029 = vpow.pop %v1028
        %v1030 = vmul.f32 %v942, 1.442695
        %v1031 = vpow.pop %v1030
        %v1032 = vmul.f32 %v943, 1.442695
        %v1033 = vpow.pop %v1032
        %v1034 = vmul.f32 %v944, 1.442695
        %v1035 = vpow.pop %v1034
        %v1036 = vmul.f32 %v945, 1.442695
        %v1037 = vpow.pop %v1036
        %v1038 = vmul.f32 %v946, 1.442695
        %v1039 = vpow.pop %v1038
        %v1040 = vmul.f32 %v947, 1.442695
        %v1041 = vpow.pop %v1040
        %v1042 = vmul.f32 %v948, 1.442695
        %v1043 = vpow.pop %v1042
        %v1044 = vmul.f32 %v949, 1.442695
        %v1045 = vpow.pop %v1044
        %v1046 = vmul.f32 %v950, 1.442695
        %v1047 = vpow.pop %v1046
        %v1048 = vmul.f32 %v951, 1.442695
        %v1049 = vpow.pop %v1048
        %v1050 = vmul.f32 %v952, 1.442695
        %v1051 = vpow.pop %v1050
        %v1052 = vmul.f32 %v953, 1.442695
        %v1053 = vpow.pop %v1052
        %v1054 = vmul.f32 %v954, 1.442695
        %v1055 = vpow.pop %v1054
        %v1056 = vmul.f32 %v955, 1.442695
        %v1057 = vpow.pop %v1056
        %v1058 = vmul.f32 %v956, 1.442695
        %v1059 = vpow.pop %v1058
        %v1060 = vmul.f32 %v957, 1.442695
        %v1061 = vpow.pop %v1060
        %v1062 = vmul.f32 %v958, 1.442695
        %v1063 = vpow.pop %v1062
        %v1064 = vmul.f32 %v959, 1.442695
        %v1065 = vpow.pop %v1064
        %v1066 = vmul.f32 %v960, 1.442695
        %v1067 = vpow.pop %v1066
        %v1068 = vmul.f32 %v961, 1.442695
        %v1069 = vpow.pop %v1068
        %v1070 = vmul.f32 %v962, 1.442695
        %v1071 = vpow.pop %v1070
        %v1072 = vmul.f32 %v963, 1.442695
        %v1073 = vpow.pop %v1072
        %v1074 = vmul.f32 %v964, 1.442695
        %v1075 = vpow.pop %v1074
        %v1076 = vmul.f32 %v965, 1.442695
        %v1077 = vpow.pop %v1076
        %v1078 = vmul.f32 %v966, 1.442695
        %v1079 = vpow.pop %v1078
        %v1080 = vmul.f32 %v967, 1.442695
        %v1081 = vpow.pop %v1080
        %v1082 = vmul.f32 %v968, 1.442695
        %v1083 = vpow.pop %v1082
        %v1084 = vmul.f32 %v969, 1.442695
        %v1085 = vpow.pop %v1084
        %v1086 = vmul.f32 %v970, 1.442695
        %v1087 = vpow.pop %v1086
        %v1088 = vmul.f32 %v971, 1.442695
        %v1089 = vpow.pop %v1088
        %v1090 = vmul.f32 %v972, 1.442695
        %v1091 = vpow.pop %v1090
        %v1092 = vmul.f32 %v973, 1.442695
        %v1093 = vpow.pop %v1092
        %v1094 = vmul.f32 %v974, 1.442695
        %v1095 = vpow.pop %v1094
        %v1096 = vmul.f32 %v975, 1.442695
        %v1097 = vpow.pop %v1096
        %v1098 = vmul.f32 %v976, 1.442695
        %v1099 = vpow.pop %v1098
        %v1100 = vmul.f32 %v977, 1.442695
        %v1101 = vpow.pop %v1100
        %v1102 = vmul.f32 %v978, 1.442695
        %v1103 = vpow.pop %v1102
        %v1104 = vmul.f32 %v979, 1.442695
        %v1105 = vpow.pop %v1104
        %v1106 = vmul.f32 %v980, 1.442695
        %v1107 = vpow.pop %v1106
        %v1108 = vmul.f32 %v981, 1.442695
        %v1109 = vpow.pop %v1108
        %v1110 = vadd.f32 %v983, %v985
        %1111 = vadd.xlane.f32.xlu0 %v1110
        %v1112 = vpop.xlane.xlu0 %1111
        %v1113 = vadd.f32 %v987, %v989
        %1114 = vadd.xlane.f32.xlu0 %v1113
        %v1115 = vpop.xlane.xlu0 %1114
        %v1116 = vadd.f32 %v991, %v993
        %1117 = vadd.xlane.f32.xlu0 %v1116
        %v1118 = vpop.xlane.xlu0 %1117
        %v1119 = vadd.f32 %v995, %v997
        %1120 = vadd.xlane.f32.xlu0 %v1119
        %v1121 = vpop.xlane.xlu0 %1120
        %v1122 = vadd.f32 %v999, %v1001
        %1123 = vadd.xlane.f32.xlu0 %v1122
        %v1124 = vpop.xlane.xlu0 %1123
        %v1125 = vadd.f32 %v1003, %v1005
        %1126 = vadd.xlane.f32.xlu0 %v1125
        %v1127 = vpop.xlane.xlu0 %1126
        %v1128 = vadd.f32 %v1007, %v1009
        %1129 = vadd.xlane.f32.xlu0 %v1128
        %v1130 = vpop.xlane.xlu0 %1129
        %v1131 = vadd.f32 %v1011, %v1013
        %1132 = vadd.xlane.f32.xlu0 %v1131
        %v1133 = vpop.xlane.xlu0 %1132
        %v1134 = vadd.f32 %v1015, %v1017
        %1135 = vadd.xlane.f32.xlu0 %v1134
        %v1136 = vpop.xlane.xlu0 %1135
        %v1137 = vadd.f32 %v1019, %v1021
        %1138 = vadd.xlane.f32.xlu0 %v1137
        %v1139 = vpop.xlane.xlu0 %1138
        %v1140 = vadd.f32 %v1023, %v1025
        %1141 = vadd.xlane.f32.xlu0 %v1140
        %v1142 = vpop.xlane.xlu0 %1141
        %v1143 = vadd.f32 %v1027, %v1029
        %1144 = vadd.xlane.f32.xlu0 %v1143
        %v1145 = vpop.xlane.xlu0 %1144
        %v1146 = vadd.f32 %v1031, %v1033
        %1147 = vadd.xlane.f32.xlu0 %v1146
        %v1148 = vpop.xlane.xlu0 %1147
        %v1149 = vadd.f32 %v1035, %v1037
        %1150 = vadd.xlane.f32.xlu0 %v1149
        %v1151 = vpop.xlane.xlu0 %1150
        %v1152 = vadd.f32 %v1039, %v1041
        %1153 = vadd.xlane.f32.xlu0 %v1152
        %v1154 = vpop.xlane.xlu0 %1153
        %v1155 = vadd.f32 %v1043, %v1045
        %1156 = vadd.xlane.f32.xlu0 %v1155
        %v1157 = vpop.xlane.xlu0 %1156
        %v1158 = vadd.f32 %v1047, %v1049
        %1159 = vadd.xlane.f32.xlu0 %v1158
        %v1160 = vpop.xlane.xlu0 %1159
        %v1161 = vadd.f32 %v1051, %v1053
        %1162 = vadd.xlane.f32.xlu0 %v1161
        %v1163 = vpop.xlane.xlu0 %1162
        %v1164 = vadd.f32 %v1055, %v1057
        %1165 = vadd.xlane.f32.xlu0 %v1164
        %v1166 = vpop.xlane.xlu0 %1165
        %v1167 = vadd.f32 %v1059, %v1061
        %1168 = vadd.xlane.f32.xlu0 %v1167
        %v1169 = vpop.xlane.xlu0 %1168
        %v1170 = vadd.f32 %v1063, %v1065
        %1171 = vadd.xlane.f32.xlu0 %v1170
        %v1172 = vpop.xlane.xlu0 %1171
        %v1173 = vadd.f32 %v1067, %v1069
        %1174 = vadd.xlane.f32.xlu0 %v1173
        %v1175 = vpop.xlane.xlu0 %1174
        %v1176 = vadd.f32 %v1071, %v1073
        %1177 = vadd.xlane.f32.xlu0 %v1176
        %v1178 = vpop.xlane.xlu0 %1177
        %v1179 = vadd.f32 %v1075, %v1077
        %1180 = vadd.xlane.f32.xlu0 %v1179
        %v1181 = vpop.xlane.xlu0 %1180
        %v1182 = vadd.f32 %v1079, %v1081
        %1183 = vadd.xlane.f32.xlu0 %v1182
        %v1184 = vpop.xlane.xlu0 %1183
        %v1185 = vadd.f32 %v1083, %v1085
        %1186 = vadd.xlane.f32.xlu0 %v1185
        %v1187 = vpop.xlane.xlu0 %1186
        %v1188 = vadd.f32 %v1087, %v1089
        %1189 = vadd.xlane.f32.xlu0 %v1188
        %v1190 = vpop.xlane.xlu0 %1189
        %v1191 = vadd.f32 %v1091, %v1093
        %1192 = vadd.xlane.f32.xlu0 %v1191
        %v1193 = vpop.xlane.xlu0 %1192
        %v1194 = vadd.f32 %v1095, %v1097
        %1195 = vadd.xlane.f32.xlu0 %v1194
        %v1196 = vpop.xlane.xlu0 %1195
        %v1197 = vadd.f32 %v1099, %v1101
        %1198 = vadd.xlane.f32.xlu0 %v1197
        %v1199 = vpop.xlane.xlu0 %1198
        %v1200 = vadd.f32 %v1103, %v1105
        %1201 = vadd.xlane.f32.xlu0 %v1200
        %v1202 = vpop.xlane.xlu0 %1201
        %v1203 = vadd.f32 %v1107, %v1109
        %1204 = vadd.xlane.f32.xlu0 %v1203
        %v1205 = vpop.xlane.xlu0 %1204
        %v1206 = vrcp.pop %v1112
        %v1207 = vrcp.pop %v1115
        %v1208 = vrcp.pop %v1118
        %v1209 = vrcp.pop %v1121
        %v1210 = vrcp.pop %v1124
        %v1211 = vrcp.pop %v1127
        %v1212 = vrcp.pop %v1130
        %v1213 = vrcp.pop %v1133
        %v1214 = vrcp.pop %v1136
        %v1215 = vrcp.pop %v1139
        %v1216 = vrcp.pop %v1142
        %v1217 = vrcp.pop %v1145
        %v1218 = vrcp.pop %v1148
        %v1219 = vrcp.pop %v1151
        %v1220 = vrcp.pop %v1154
        %v1221 = vrcp.pop %v1157
        %v1222 = vrcp.pop %v1160
        %v1223 = vrcp.pop %v1163
        %v1224 = vrcp.pop %v1166
        %v1225 = vrcp.pop %v1169
        %v1226 = vrcp.pop %v1172
        %v1227 = vrcp.pop %v1175
        %v1228 = vrcp.pop %v1178
        %v1229 = vrcp.pop %v1181
        %v1230 = vrcp.pop %v1184
        %v1231 = vrcp.pop %v1187
        %v1232 = vrcp.pop %v1190
        %v1233 = vrcp.pop %v1193
        %v1234 = vrcp.pop %v1196
        %v1235 = vrcp.pop %v1199
        %v1236 = vrcp.pop %v1202
        %v1237 = vrcp.pop %v1205
        %v1238 = vmul.f32 %v983, %v1206
        %v1239 = vmul.f32 %v985, %v1206
        %v1240 = vmul.f32 %v987, %v1207
        %v1241 = vmul.f32 %v989, %v1207
        %v1242 = vmul.f32 %v991, %v1208
        %v1243 = vmul.f32 %v993, %v1208
        %v1244 = vmul.f32 %v995, %v1209
        %v1245 = vmul.f32 %v997, %v1209
        %v1246 = vmul.f32 %v999, %v1210
        %v1247 = vmul.f32 %v1001, %v1210
        %v1248 = vmul.f32 %v1003, %v1211
        %v1249 = vmul.f32 %v1005, %v1211
        %v1250 = vmul.f32 %v1007, %v1212
        %v1251 = vmul.f32 %v1009, %v1212
        %v1252 = vmul.f32 %v1011, %v1213
        %v1253 = vmul.f32 %v1013, %v1213
        %v1254 = vmul.f32 %v1015, %v1214
        %v1255 = vmul.f32 %v1017, %v1214
        %v1256 = vmul.f32 %v1019, %v1215
        %v1257 = vmul.f32 %v1021, %v1215
        %v1258 = vmul.f32 %v1023, %v1216
        %v1259 = vmul.f32 %v1025, %v1216
        %v1260 = vmul.f32 %v1027, %v1217
        %v1261 = vmul.f32 %v1029, %v1217
        %v1262 = vmul.f32 %v1031, %v1218
        %v1263 = vmul.f32 %v1033, %v1218
        %v1264 = vmul.f32 %v1035, %v1219
        %v1265 = vmul.f32 %v1037, %v1219
        %v1266 = vmul.f32 %v1039, %v1220
        %v1267 = vmul.f32 %v1041, %v1220
        %v1268 = vmul.f32 %v1043, %v1221
        %v1269 = vmul.f32 %v1045, %v1221
        %v1270 = vmul.f32 %v1047, %v1222
        %v1271 = vmul.f32 %v1049, %v1222
        %v1272 = vmul.f32 %v1051, %v1223
        %v1273 = vmul.f32 %v1053, %v1223
        %v1274 = vmul.f32 %v1055, %v1224
        %v1275 = vmul.f32 %v1057, %v1224
        %v1276 = vmul.f32 %v1059, %v1225
        %v1277 = vmul.f32 %v1061, %v1225
        %v1278 = vmul.f32 %v1063, %v1226
        %v1279 = vmul.f32 %v1065, %v1226
        %v1280 = vmul.f32 %v1067, %v1227
        %v1281 = vmul.f32 %v1069, %v1227
        %v1282 = vmul.f32 %v1071, %v1228
        %v1283 = vmul.f32 %v1073, %v1228
        %v1284 = vmul.f32 %v1075, %v1229
        %v1285 = vmul.f32 %v1077, %v1229
        %v1286 = vmul.f32 %v1079, %v1230
        %v1287 = vmul.f32 %v1081, %v1230
        %v1288 = vmul.f32 %v1083, %v1231
        %v1289 = vmul.f32 %v1085, %v1231
        %v1290 = vmul.f32 %v1087, %v1232
        %v1291 = vmul.f32 %v1089, %v1232
        %v1292 = vmul.f32 %v1091, %v1233
        %v1293 = vmul.f32 %v1093, %v1233
        %v1294 = vmul.f32 %v1095, %v1234
        %v1295 = vmul.f32 %v1097, %v1234
        %v1296 = vmul.f32 %v1099, %v1235
        %v1297 = vmul.f32 %v1101, %v1235
        %v1298 = vmul.f32 %v1103, %v1236
        %v1299 = vmul.f32 %v1105, %v1236
        %v1300 = vmul.f32 %v1107, %v1237
        %v1301 = vmul.f32 %v1109, %v1237
        %1302 = vmatprep.subr.mxu0 %v1269
        %1303 = vmatpush1.xpose.msra.mxu0 %v1268
        %1304 = vmatprep.subr.mxu0 %v1267
        %1305 = vmatpush1.xpose.msra.mxu0 %v1266
        %1306 = vmatprep.subr.mxu0 %v1265
        %1307 = vmatpush1.xpose.msra.mxu0 %v1264
        %1308 = vmatprep.subr.mxu0 %v1263
        %1309 = vmatpush1.xpose.msra.mxu0 %v1262
        %1310 = vmatprep.subr.mxu0 %v1261
        %1311 = vmatpush1.xpose.msra.mxu0 %v1260
        %1312 = vmatprep.subr.mxu0 %v1259
        %1313 = vmatpush1.xpose.msra.mxu0 %v1258
        %1314 = vmatprep.subr.mxu0 %v1257
        %1315 = vmatpush1.xpose.msra.mxu0 %v1256
        %1316 = vmatprep.subr.mxu0 %v1255
        %1317 = vmatpush1.xpose.msra.mxu0 %v1254
        %1318 = vmatprep.subr.mxu0 %v1253
        %1319 = vmatpush1.xpose.msra.mxu0 %v1252
        %1320 = vmatprep.subr.mxu0 %v1251
        %1321 = vmatpush1.xpose.msra.mxu0 %v1250
        %1322 = vmatprep.subr.mxu0 %v1249
        %1323 = vmatpush1.xpose.msra.mxu0 %v1248
        %1324 = vmatprep.subr.mxu0 %v1247
        %1325 = vmatpush1.xpose.msra.mxu0 %v1246
        %1326 = vmatprep.subr.mxu0 %v1245
        %1327 = vmatpush1.xpose.msra.mxu0 %v1244
        %1328 = vmatprep.subr.mxu0 %v1243
        %1329 = vmatpush1.xpose.msra.mxu0 %v1242
        %1330 = vmatprep.subr.mxu0 %v1241
        %1331 = vmatpush1.xpose.msra.mxu0 %v1240
        %1332 = vmatprep.subr.mxu0 %v1239
        %1333 = vmatpush1.xpose.msra.mxu0 %v1238
        %1334 = vmatprep.subr.mxu0 %v1301
        %1335 = vmatpush2.xpose.msra.mxu0 %v1300
        %1336 = vmatprep.subr.mxu0 %v1299
        %1337 = vmatpush2.xpose.msra.mxu0 %v1298
        %1338 = vmatprep.subr.mxu0 %v1297
        %1339 = vmatpush2.xpose.msra.mxu0 %v1296
        %1340 = vmatprep.subr.mxu0 %v1295
        %1341 = vmatpush2.xpose.msra.mxu0 %v1294
        %1342 = vmatprep.subr.mxu0 %v1293
        %1343 = vmatpush2.xpose.msra.mxu0 %v1292
        %1344 = vmatprep.subr.mxu0 %v1291
        %1345 = vmatpush2.xpose.msra.mxu0 %v1290
        %1346 = vmatprep.subr.mxu0 %v1289
        %1347 = vmatpush2.xpose.msra.mxu0 %v1288
        %1348 = vmatprep.subr.mxu0 %v1287
        %1349 = vmatpush2.xpose.msra.mxu0 %v1286
        %1350 = vmatprep.subr.mxu0 %v1285
        %1351 = vmatpush2.xpose.msra.mxu0 %v1284
        %1352 = vmatprep.subr.mxu0 %v1283
        %1353 = vmatpush2.xpose.msra.mxu0 %v1282
        %1354 = vmatprep.subr.mxu0 %v1281
        %1355 = vmatpush2.xpose.msra.mxu0 %v1280
        %1356 = vmatprep.subr.mxu0 %v1279
        %1357 = vmatpush2.xpose.msra.mxu0 %v1278
        %1358 = vmatprep.subr.mxu0 %v1277
        %1359 = vmatpush2.xpose.msra.mxu0 %v1276
        %1360 = vmatprep.subr.mxu0 %v1275
        %1361 = vmatpush2.xpose.msra.mxu0 %v1274
        %1362 = vmatprep.subr.mxu0 %v1273
        %1363 = vmatpush2.xpose.msra.mxu0 %v1272
        %1364 = vmatprep.subr.mxu0 %v1271
        %1365 = vmatpush2.xpose.msra.mxu0 %v1270
        %1366 = vmatprep.mubr.f32.mxu0 %v453
        %1367 = vmatmul.mubr.f32.gmra.mxu0 %v452
        %v1368 = vpop.f32.mrf.mxu0
        %v1369 = vadd.f32 0.0, %v1368
        %v1370 = vpop.f32.mrf.mxu0
        %v1371 = vadd.f32 0.0, %v1370
        %1372 = vmatprep.mubr.f32.mxu0 %v455
        %1373 = vmatmul.mubr.f32.gmra.mxu0 %v454
        %v1374 = vpop.f32.mrf.mxu0
        %v1375 = vadd.f32 0.0, %v1374
        %v1376 = vpop.f32.mrf.mxu0
        %v1377 = vadd.f32 0.0, %v1376
        %1378 = vdwg.mxu0
        %s1379 = sld [smem:[#allocation2]]
        %v1380 = vstv %s1379
        %v1381 = vmul.f32 %v1380, %v1369
        %v1382 = vmul.f32 %v1380, %v1371
        %v1383 = vmul.f32 %v1380, %v1375
        %v1384 = vmul.f32 %v1380, %v1377
        %v1385 = vld [vmem:[%s403] sm:$0xff]
        %v1386 = vld [vmem:[%s403 + $0x8] sm:$0xff]
        %v1387 = vld [vmem:[%s403 + $0x10] sm:$0xff]
        %v1388 = vld [vmem:[%s403 + $0x18] sm:$0xff]
        %v1389 = vadd.f32 %v1381, %v1385
        %v1390 = vadd.f32 %v1382, %v1386
        %v1391 = vadd.f32 %v1383, %v1387
        %v1392 = vadd.f32 %v1384, %v1388
        %1393 = vst [vmem:[%s372] sm:$0xff] %v1389
        %1394 = vst [vmem:[%s372 + $0x8] sm:$0xff] %v1390
        %1395 = vst [vmem:[%s372 + $0x10] sm:$0xff] %v1391
        %1396 = vst [vmem:[%s372 + $0x18] sm:$0xff] %v1392
        %1397 = vst [vmem:[%s379] sm:$0xff] %v1238
        %1398 = vst [vmem:[%s379 + $0x8] sm:$0xff] %v1239
        %1399 = vst [vmem:[%s379 + $0x10] sm:$0xff] %v1240
        %1400 = vst [vmem:[%s379 + $0x18] sm:$0xff] %v1241
        %1401 = vst [vmem:[%s379 + $0x20] sm:$0xff] %v1242
        %1402 = vst [vmem:[%s379 + $0x28] sm:$0xff] %v1243
        %1403 = vst [vmem:[%s379 + $0x30] sm:$0xff] %v1244
        %1404 = vst [vmem:[%s379 + $0x38] sm:$0xff] %v1245
        %1405 = vst [vmem:[%s379 + $0x40] sm:$0xff] %v1246
        %1406 = vst [vmem:[%s379 + $0x48] sm:$0xff] %v1247
        %1407 = vst [vmem:[%s379 + $0x50] sm:$0xff] %v1248
        %1408 = vst [vmem:[%s379 + $0x58] sm:$0xff] %v1249
        %1409 = vst [vmem:[%s379 + $0x60] sm:$0xff] %v1250
        %1410 = vst [vmem:[%s379 + $0x68] sm:$0xff] %v1251
        %1411 = vst [vmem:[%s379 + $0x70] sm:$0xff] %v1252
        %1412 = vst [vmem:[%s379 + $0x78] sm:$0xff] %v1253
        %1413 = vst [vmem:[%s379 + $0x80] sm:$0xff] %v1254
        %1414 = vst [vmem:[%s379 + $0x88] sm:$0xff] %v1255
        %1415 = vst [vmem:[%s379 + $0x90] sm:$0xff] %v1256
        %1416 = vst [vmem:[%s379 + $0x98] sm:$0xff] %v1257
        %1417 = vst [vmem:[%s379 + $0xa0] sm:$0xff] %v1258
        %1418 = vst [vmem:[%s379 + $0xa8] sm:$0xff] %v1259
        %1419 = vst [vmem:[%s379 + $0xb0] sm:$0xff] %v1260
        %1420 = vst [vmem:[%s379 + $0xb8] sm:$0xff] %v1261
        %1421 = vst [vmem:[%s379 + $0xc0] sm:$0xff] %v1262
        %1422 = vst [vmem:[%s379 + $0xc8] sm:$0xff] %v1263
        %1423 = vst [vmem:[%s379 + $0xd0] sm:$0xff] %v1264
        %1424 = vst [vmem:[%s379 + $0xd8] sm:$0xff] %v1265
        %1425 = vst [vmem:[%s379 + $0xe0] sm:$0xff] %v1266
        %1426 = vst [vmem:[%s379 + $0xe8] sm:$0xff] %v1267
        %1427 = vst [vmem:[%s379 + $0xf0] sm:$0xff] %v1268
        %1428 = vst [vmem:[%s379 + $0xf8] sm:$0xff] %v1269
        %1429 = vst [vmem:[%s379 + $0x100] sm:$0xff] %v1270
        %1430 = vst [vmem:[%s379 + $0x108] sm:$0xff] %v1271
        %1431 = vst [vmem:[%s379 + $0x110] sm:$0xff] %v1272
        %1432 = vst [vmem:[%s379 + $0x118] sm:$0xff] %v1273
        %1433 = vst [vmem:[%s379 + $0x120] sm:$0xff] %v1274
        %1434 = vst [vmem:[%s379 + $0x128] sm:$0xff] %v1275
        %1435 = vst [vmem:[%s379 + $0x130] sm:$0xff] %v1276
        %1436 = vst [vmem:[%s379 + $0x138] sm:$0xff] %v1277
        %1437 = vst [vmem:[%s379 + $0x140] sm:$0xff] %v1278
        %1438 = vst [vmem:[%s379 + $0x148] sm:$0xff] %v1279
        %1439 = vst [vmem:[%s379 + $0x150] sm:$0xff] %v1280
        %1440 = vst [vmem:[%s379 + $0x158] sm:$0xff] %v1281
        %1441 = vst [vmem:[%s379 + $0x160] sm:$0xff] %v1282
        %1442 = vst [vmem:[%s379 + $0x168] sm:$0xff] %v1283
        %1443 = vst [vmem:[%s379 + $0x170] sm:$0xff] %v1284
        %1444 = vst [vmem:[%s379 + $0x178] sm:$0xff] %v1285
        %1445 = vst [vmem:[%s379 + $0x180] sm:$0xff] %v1286
        %1446 = vst [vmem:[%s379 + $0x188] sm:$0xff] %v1287
        %1447 = vst [vmem:[%s379 + $0x190] sm:$0xff] %v1288
        %1448 = vst [vmem:[%s379 + $0x198] sm:$0xff] %v1289
        %1449 = vst [vmem:[%s379 + $0x1a0] sm:$0xff] %v1290
        %1450 = vst [vmem:[%s379 + $0x1a8] sm:$0xff] %v1291
        %1451 = vst [vmem:[%s379 + $0x1b0] sm:$0xff] %v1292
        %1452 = vst [vmem:[%s379 + $0x1b8] sm:$0xff] %v1293
        %1453 = vst [vmem:[%s379 + $0x1c0] sm:$0xff] %v1294
        %1454 = vst [vmem:[%s379 + $0x1c8] sm:$0xff] %v1295
        %1455 = vst [vmem:[%s379 + $0x1d0] sm:$0xff] %v1296
        %1456 = vst [vmem:[%s379 + $0x1d8] sm:$0xff] %v1297
        %1457 = vst [vmem:[%s379 + $0x1e0] sm:$0xff] %v1298
        %1458 = vst [vmem:[%s379 + $0x1e8] sm:$0xff] %v1299
        %1459 = vst [vmem:[%s379 + $0x1f0] sm:$0xff] %v1300
        %1460 = vst [vmem:[%s379 + $0x1f8] sm:$0xff] %v1301
        %s1461 = sand.u32 %s203, 1
        %s1462 = scalar_lea.sflag [#allocation4], %s1461
        %s1463 = sand.u32 %s203, 1
        %s1464 = smul.addr %s1463, 32
        %s1465 = scalar_lea.vmem [#allocation3], %s1464
        %s1466 = sand.u32 %s231, 1
        %s1467 = scalar_lea.sflag [#allocation6], %s1466
        %s1468 = sand.u32 %s231, 1
        %s1469 = smul.addr %s1468, 512
        %s1470 = scalar_lea.vmem [#allocation5], %s1469
        // Predicated region
        $region45: #{tpu_custom_call.1} parent=43 // pred_check
          %p1471 = pneg %p213
        $region46: #{tpu_custom_call.1} parent=43 // pred_check_branch
          %1473 = sbr.rel (%p1471) target = $region48
        $region47: #{tpu_custom_call.1} parent=43 // pred_region
          %s1474 = smul.u32 2, %s31
          %s1476 = ssub.s32 512, 512
          %1477 = vsyncadd %s1462, %s1476
          %s1478 = smul.addr %s30, 4
          %s1479 = sadd.s32 %s1474, %s1478
          %s1480 = smul.addr %s1479, 128
          %s1481 = scalar_lea.hbm %s6, %s1480
          %s1482 = sshll.u32 %s1465, 4
          %s1483 = int_to_ptr.vmem [resolvable:$true] %s1482
          %1488 = dma.vmem_to_hbm [thread:$0]  %s1483, 512, %s1481, %s1462, 256, 256, 16
        $region48: #{tpu_custom_call.1} parent=43 // pred_fallthru
          _
        // Predicated region
        $region49: #{tpu_custom_call.1} parent=43 // pred_check
          %p1489 = pneg %p241
        $region50: #{tpu_custom_call.1} parent=43 // pred_check_branch
          %1491 = sbr.rel (%p1489) target = $region52
        $region51: #{tpu_custom_call.1} parent=43 // pred_region
          %s1492 = smul.u32 32, %s31
          %s1494 = ssub.s32 8192, 8192
          %1495 = vsyncadd %s1467, %s1494
          %s1496 = smul.addr %s1492, 2
          %s1497 = smul.addr %s30, 64
          %s1498 = sadd.s32 %s1496, %s1497
          %s1499 = smul.addr %s1498, 128
          %s1500 = scalar_lea.hbm %s7, %s1499
          %s1501 = sshll.u32 %s1470, 4
          %s1502 = int_to_ptr.vmem [resolvable:$true] %s1501
          %1507 = dma.vmem_to_hbm [thread:$0]  %s1502, 8192, %s1500, %s1467, 256, 256, 16
        $region52: #{tpu_custom_call.1} parent=43 // pred_fallthru
          _
      $region44: #{tpu_custom_call.1} parent=5 // pred_fallthru
        _
      %p1508 = scmp.le.s32.totalorder 2, %s21
      // Predicated region
      $region53: #{tpu_custom_call.1} parent=5 // pred_check
        %p1509 = pneg %p1508
      $region54: #{tpu_custom_call.1} parent=5 // pred_check_branch
        %1511 = sbr.rel (%p1509) target = $region56
      $region55: #{tpu_custom_call.1} parent=5 // pred_region
        %s1512 = ssub.s32 %s21, 2
        // Predicated region
        $region57: #{tpu_custom_call.1} parent=55 // pred_check
          %p1513 = pneg %p219
        $region58: #{tpu_custom_call.1} parent=55 // pred_check_branch
          %1515 = sbr.rel (%p1513) target = $region60
        $region59: #{tpu_custom_call.1} parent=55 // pred_region
          %s1516 = sand.u32 %s204, 1
          %s1517 = scalar_lea.sflag [#allocation4], %s1516
          %s1518 = sand.u32 %s204, 1
          %s1519 = smul.addr %s1518, 32
          %s1520 = scalar_lea.vmem [#allocation3], %s1519
          %1521 = dma.done %s1517, 512
        $region60: #{tpu_custom_call.1} parent=55 // pred_fallthru
          _
        // Predicated region
        $region61: #{tpu_custom_call.1} parent=55 // pred_check
          %p1522 = pneg %p247
        $region62: #{tpu_custom_call.1} parent=55 // pred_check_branch
          %1524 = sbr.rel (%p1522) target = $region64
        $region63: #{tpu_custom_call.1} parent=55 // pred_region
          %s1525 = sand.u32 %s232, 1
          %s1526 = scalar_lea.sflag [#allocation6], %s1525
          %s1527 = sand.u32 %s232, 1
          %s1528 = smul.addr %s1527, 512
          %s1529 = scalar_lea.vmem [#allocation5], %s1528
          %1530 = dma.done %s1526, 8192
        $region64: #{tpu_custom_call.1} parent=55 // pred_fallthru
          _
      $region56: #{tpu_custom_call.1} parent=5 // pred_fallthru
        _
    $region6: #{tpu_custom_call.1} parent=1 // loop_footer
      %s25 = sadd.s32 1, %s21
    $region7: #{tpu_custom_call.1} parent=1 // loop_footer_branch
      %20 = sbr.rel target = $region3
    $region8: #{tpu_custom_call.1} parent=1 // loop_exit
      _
    %1531 = vsyncpa [#allocation4], 1
    %s1532 = scalar_lea.sflag [#allocation4], 1
    %1533 = vsyncpa %s1532, 1
    %1534 = vsyncpa [#allocation6], 1
    %s1535 = scalar_lea.sflag [#allocation6], 1
    %1536 = vsyncpa %s1535, 1

</llo_original>
